<compile_context>
chip_gen: v6e
topology: v6e:2x2x1
jax: 0.10.0
libtpu: 0.0.40
codegen_flags: <defaults>
</compile_context>

<pallas_src>
import functools

import numpy as np
import jax
import jax.numpy as jnp
from jax.experimental import pallas as pl
from jax.experimental.pallas import tpu as pltpu

EPS = 1e-5  # torch.nn.BatchNorm2d default eps


def _fused_double_conv_kernel(x_ref, pp_ref, out_ref, *,
                              N, H, W, K, Cin, Cmid, Cout, Rp):
    """Fused (Conv3x3 pad=1 bias=False + BatchNorm2d(batch stats) + Tanh) x 2.

    x_ref   : (Cin,  N*H*W)   input, channels on sublanes, batch*spatial on lanes
    pp_ref  : (Rp+K*K, Wp)    packed params:
                rows [0:Rp]      lanes [0:P1)        = w1  (Cmid, K*K*Cin)
                                 lanes [P1:P1+P2)    = w2  (Cout, K*K*Cmid)
                                 lanes c0..c0+3      = gamma1, beta1, gamma2, beta2
                rows [Rp:Rp+K*K] lanes [0:N*H*W)     = 0/1 tap-validity masks
    out_ref : (Cout, N*H*W)   lane-dense output
    """
    HW = H * W
    NHW = N * HW
    pad = K // 2
    P1 = K * K * Cin
    P2 = K * K * Cmid
    c0 = P1 + P2
    cnt = jnp.float32(NHW)          # BatchNorm2d population count (N*H*W)

    def conv_bn_tanh(xin, c_in, c_out, wcol, gcol):
        # Tap-wise accumulation: roll (XLU) + mask (VPU) + tiny MXU dot per tap.
        acc = None
        for ky in range(K):
            for kx in range(K):
                t = ky * K + kx
                s = (ky - pad) * W + (kx - pad)          # static source offset
                if s == 0:
                    patch = xin                          # center tap, always valid
                else:
                    patch = pltpu.roll(xin, shift=(-s) % NHW, axis=1)
                    # mask kills width wrap AND top/bottom (padding) rows
                    patch = patch * pp_ref[Rp + t:Rp + t + 1, 0:NHW]
                wt = pp_ref[0:c_out, wcol + t * c_in: wcol + (t + 1) * c_in]
                d = jnp.dot(wt.astype(jnp.bfloat16),
                            patch.astype(jnp.bfloat16),
                            preferred_element_type=jnp.float32)
                acc = d if acc is None else acc + d      # (c_out, NHW) f32

        # BatchNorm2d (training-mode biased stats over N,H,W), one pass, f32.
        gamma = pp_ref[0:c_out, gcol:gcol + 1]           # (c_out, 1)
        beta = pp_ref[0:c_out, gcol + 1:gcol + 2]
        mean = jnp.sum(acc, axis=1, keepdims=True) / cnt
        var = jnp.sum(acc * acc, axis=1, keepdims=True) / cnt - mean * mean
        return jnp.tanh((acc - mean) * jax.lax.rsqrt(var + EPS) * gamma + beta)

    x = x_ref[...].astype(jnp.float32)                   # (Cin, NHW)
    h = conv_bn_tanh(x, Cin, Cmid, 0, c0)                # (Cmid, NHW), stays in vregs
    y = conv_bn_tanh(h, Cmid, Cout, P1, c0 + 2)          # (Cout, NHW)
    out_ref[...] = y.astype(out_ref.dtype)               # lane-dense unmasked store


def double_convolution_pallas(x_nchw, params):
    """double_convolution forward.  Input/output are NCHW (PyTorch layout)."""
    N, Cin, H, W = x_nchw.shape
    K = params["w1"].shape[0]
    Cmid = params["w1"].shape[3]
    Cout = params["w2"].shape[3]
    pad = K // 2
    HW = H * W
    NHW = N * HW
    KK = K * K
    P1, P2 = KK * Cin, KK * Cmid
    c0 = P1 + P2
    Rp = ((max(Cmid, Cout) + 7) // 8) * 8     # 8-aligned param row block
    Wp = max(NHW, c0 + 4)

    # Channel-on-sublane, (batch*spatial)-on-lane.  Tiny wrapper-side transpose.
    x2d = jnp.transpose(x_nchw, (1, 0, 2, 3)).reshape(Cin, NHW)

    # ---- static 0/1 tap-validity masks (cover pad rows AND pad cols) --------
    h_idx = np.arange(HW, dtype=np.int64) // W
    w_idx = np.arange(HW, dtype=np.int64) % W
    masks = np.zeros((KK, NHW), np.float32)
    for ky in range(K):
        for kx in range(K):
            ok = ((h_idx + ky - pad >= 0) & (h_idx + ky - pad < H) &
                  (w_idx + kx - pad >= 0) & (w_idx + kx - pad < W))
            masks[ky * K + kx] = np.tile(ok.astype(np.float32), N)

    # ---- pack all small operands into ONE lane-dense array (one DMA) --------
    # Conv weights HWIO -> (Cout, K*K*Cin); column order (ky, kx, ci).
    w1 = params["w1"].transpose(3, 0, 1, 2).reshape(Cmid, P1)
    w2 = params["w2"].transpose(3, 0, 1, 2).reshape(Cout, P2)
    blk = jnp.zeros((Rp, Wp), jnp.float32)
    blk = blk.at[:Cmid, 0:P1].set(w1)
    blk = blk.at[:Cout, P1:c0].set(w2)
    blk = blk.at[:Cmid, c0 + 0].set(params["gamma1"])
    blk = blk.at[:Cmid, c0 + 1].set(params["beta1"])
    blk = blk.at[:Cout, c0 + 2].set(params["gamma2"])
    blk = blk.at[:Cout, c0 + 3].set(params["beta2"])
    mrows = jnp.zeros((KK, Wp), jnp.float32).at[:, 0:NHW].set(jnp.asarray(masks))
    pp = jnp.concatenate([blk, mrows], axis=0)            # (Rp+KK, Wp)

    kernel = functools.partial(_fused_double_conv_kernel,
                               N=N, H=H, W=W, K=K,
                               Cin=Cin, Cmid=Cmid, Cout=Cout, Rp=Rp)

    out2d = pl.pallas_call(
        kernel,
        out_shape=jax.ShapeDtypeStruct((Cout, NHW), x_nchw.dtype),
        grid=(1,),
        in_specs=[pl.BlockSpec((Cin, NHW), lambda i: (0, 0)),
                  pl.BlockSpec((Rp + KK, Wp), lambda i: (0, 0))],
        out_specs=pl.BlockSpec((Cout, NHW), lambda i: (0, 0)),
        compiler_params=pltpu.CompilerParams(
            dimension_semantics=("arbitrary",)),
    )(x2d, pp)

    return jnp.transpose(out2d.reshape(Cout, N, H, W), (1, 0, 2, 3))


# -------------------- pure-JAX reference (for verification) --------------------
def _ref_conv_layer(x_nhwc, w, gamma, beta):
    pad = w.shape[0] // 2
    y = jax.lax.conv_general_dilated(
        x_nhwc, w, window_strides=(1, 1),
        padding=((pad, pad), (pad, pad)),
        dimension_numbers=("NHWC", "HWIO", "NHWC"))
    mean = y.mean(axis=(0, 1, 2), keepdims=True)
    var = ((y - mean) ** 2).mean(axis=(0, 1, 2), keepdims=True)
    return jnp.tanh((y - mean) * jax.lax.rsqrt(var + EPS) * gamma + beta)


def _ref_double_convolution(x_nchw, params):
    x = jnp.transpose(x_nchw, (0, 2, 3, 1))
    h = _ref_conv_layer(x, params["w1"], params["gamma1"], params["beta1"])
    y = _ref_conv_layer(h, params["w2"], params["gamma2"], params["beta2"])
    return jnp.transpose(y, (0, 3, 1, 2))


if __name__ == "__main__":
    # Module defaults: input_channels=2, mid_channels=8, output_channels=2, k=3.
    N, Cin, Cmid, Cout, H, W, K = 2, 2, 8, 2, 16, 16, 3

    key = jax.random.PRNGKey(0)
    kx, kw1, kw2 = jax.random.split(key, 3)

    x = jax.random.normal(kx, (N, Cin, H, W), dtype=jnp.float32)  # NCHW input

    params = {
        # Conv weights in HWIO (PyTorch OIHW transposed); bias=False.
        "w1": jax.random.normal(kw1, (K, K, Cin, Cmid), jnp.float32) * 0.2,
        "w2": jax.random.normal(kw2, (K, K, Cmid, Cout), jnp.float32) * 0.2,
        # BatchNorm2d default init: weight=1, bias=0.
        "gamma1": jnp.ones((Cmid,), jnp.float32),
        "beta1": jnp.zeros((Cmid,), jnp.float32),
        "gamma2": jnp.ones((Cout,), jnp.float32),
        "beta2": jnp.zeros((Cout,), jnp.float32),
    }

    out = jax.block_until_ready(double_convolution_pallas(x, params))
    ref = jax.block_until_ready(_ref_double_convolution(x, params))

    assert out.shape == (N, Cout, H, W), out.shape
    # MXU operands are bf16 (f32 accumulation / BN / tanh); reference is full f32,
    # so tolerance is set for bf16 matmul rounding (~1e-2 worst-case on tanh output).
    err_max = float(jnp.max(jnp.abs(out - ref)))
    err_mean = float(jnp.mean(jnp.abs(out - ref)))
    assert jnp.allclose(out, ref, atol=5e-2, rtol=5e-2), (err_max, err_mean)
    assert err_mean < 2e-2, (err_max, err_mean)
    print("KERNEL_OK")
</pallas_src>

<mosaic_0001>
module attributes {stable_mosaic.version = 11 : i64} {
  func.func @_fused_double_conv_kernel(%arg0: i32, %arg1: memref<2x512xf32, #tpu.memory_space<vmem>>, %arg2: memref<17x512xf32, #tpu.memory_space<vmem>>, %arg3: memref<2x512xf32, #tpu.memory_space<vmem>>) attributes {dimension_semantics = [#tpu.dimension_semantics<arbitrary>], iteration_bounds = array<i64: 1>, scalar_prefetch = 0 : i64, scratch_operands = 0 : i64, tpu.core_type = #tpu.core_type<tc>, window_params = [{pipeline_mode = #tpu.pipeline_mode<synchronous>, transform_indices = @transform_0, window_bounds = array<i64: 2, 512>}, {pipeline_mode = #tpu.pipeline_mode<synchronous>, transform_indices = @transform_1, window_bounds = array<i64: 17, 512>}, {pipeline_mode = #tpu.pipeline_mode<synchronous>, transform_indices = @transform_2, window_bounds = array<i64: 2, 512>}]} {
    %c0 = arith.constant 0 : index
    %c0_0 = arith.constant 0 : index
    %0 = vector.load %arg1[%c0, %c0_0] : memref<2x512xf32, #tpu.memory_space<vmem>>, vector<2x512xf32>
    %c17_i32 = arith.constant 17 : i32
    %1 = tpu.dynamic_rotate %0 by %c17_i32 dim 1 : vector<2x512xf32>, i32 -> vector<2x512xf32>
    %c8 = arith.constant 8 : index
    %c0_1 = arith.constant 0 : index
    %2 = vector.load %arg2[%c8, %c0_1] : memref<17x512xf32, #tpu.memory_space<vmem>>, vector<1x512xf32>
    %3 = vector.broadcast %2 : vector<1x512xf32> to vector<2x512xf32>
    %4 = arith.mulf %1, %3 : vector<2x512xf32>
    %c0_2 = arith.constant 0 : index
    %c0_3 = arith.constant 0 : index
    %5 = vector.load %arg2[%c0_2, %c0_3] : memref<17x512xf32, #tpu.memory_space<vmem>>, vector<8x2xf32>
    %6 = arith.truncf %5 : vector<8x2xf32> to vector<8x2xbf16>
    %7 = arith.truncf %4 : vector<2x512xf32> to vector<2x512xbf16>
    %cst = arith.constant dense<0.000000e+00> : vector<8x512xf32>
    %8 = tpu.matmul %6, %7, %cst {dimension_numbers = #tpu.dot_dimension_numbers<[1], [0], [0], [1], [0, 0, 1, 1], [], []>} : vector<8x2xbf16>, vector<2x512xbf16>, vector<8x512xf32> -> vector<8x512xf32>
    %c16_i32 = arith.constant 16 : i32
    %9 = tpu.dynamic_rotate %0 by %c16_i32 dim 1 : vector<2x512xf32>, i32 -> vector<2x512xf32>
    %c9 = arith.constant 9 : index
    %c0_4 = arith.constant 0 : index
    %10 = vector.load %arg2[%c9, %c0_4] : memref<17x512xf32, #tpu.memory_space<vmem>>, vector<1x512xf32>
    %11 = vector.broadcast %10 : vector<1x512xf32> to vector<2x512xf32>
    %12 = arith.mulf %9, %11 : vector<2x512xf32>
    %c0_5 = arith.constant 0 : index
    %c2 = arith.constant 2 : index
    %13 = vector.load %arg2[%c0_5, %c2] : memref<17x512xf32, #tpu.memory_space<vmem>>, vector<8x2xf32>
    %14 = arith.truncf %13 : vector<8x2xf32> to vector<8x2xbf16>
    %15 = arith.truncf %12 : vector<2x512xf32> to vector<2x512xbf16>
    %cst_6 = arith.constant dense<0.000000e+00> : vector<8x512xf32>
    %16 = tpu.matmul %14, %15, %cst_6 {dimension_numbers = #tpu.dot_dimension_numbers<[1], [0], [0], [1], [0, 0, 1, 1], [], []>} : vector<8x2xbf16>, vector<2x512xbf16>, vector<8x512xf32> -> vector<8x512xf32>
    %17 = arith.addf %8, %16 : vector<8x512xf32>
    %c15_i32 = arith.constant 15 : i32
    %18 = tpu.dynamic_rotate %0 by %c15_i32 dim 1 : vector<2x512xf32>, i32 -> vector<2x512xf32>
    %c10 = arith.constant 10 : index
    %c0_7 = arith.constant 0 : index
    %19 = vector.load %arg2[%c10, %c0_7] : memref<17x512xf32, #tpu.memory_space<vmem>>, vector<1x512xf32>
    %20 = vector.broadcast %19 : vector<1x512xf32> to vector<2x512xf32>
    %21 = arith.mulf %18, %20 : vector<2x512xf32>
    %c0_8 = arith.constant 0 : index
    %c4 = arith.constant 4 : index
    %22 = vector.load %arg2[%c0_8, %c4] : memref<17x512xf32, #tpu.memory_space<vmem>>, vector<8x2xf32>
    %23 = arith.truncf %22 : vector<8x2xf32> to vector<8x2xbf16>
    %24 = arith.truncf %21 : vector<2x512xf32> to vector<2x512xbf16>
    %cst_9 = arith.constant dense<0.000000e+00> : vector<8x512xf32>
    %25 = tpu.matmul %23, %24, %cst_9 {dimension_numbers = #tpu.dot_dimension_numbers<[1], [0], [0], [1], [0, 0, 1, 1], [], []>} : vector<8x2xbf16>, vector<2x512xbf16>, vector<8x512xf32> -> vector<8x512xf32>
    %26 = arith.addf %17, %25 : vector<8x512xf32>
    %c1_i32 = arith.constant 1 : i32
    %27 = tpu.dynamic_rotate %0 by %c1_i32 dim 1 : vector<2x512xf32>, i32 -> vector<2x512xf32>
    %c11 = arith.constant 11 : index
    %c0_10 = arith.constant 0 : index
    %28 = vector.load %arg2[%c11, %c0_10] : memref<17x512xf32, #tpu.memory_space<vmem>>, vector<1x512xf32>
    %29 = vector.broadcast %28 : vector<1x512xf32> to vector<2x512xf32>
    %30 = arith.mulf %27, %29 : vector<2x512xf32>
    %c0_11 = arith.constant 0 : index
    %c6 = arith.constant 6 : index
    %31 = vector.load %arg2[%c0_11, %c6] : memref<17x512xf32, #tpu.memory_space<vmem>>, vector<8x2xf32>
    %32 = arith.truncf %31 : vector<8x2xf32> to vector<8x2xbf16>
    %33 = arith.truncf %30 : vector<2x512xf32> to vector<2x512xbf16>
    %cst_12 = arith.constant dense<0.000000e+00> : vector<8x512xf32>
    %34 = tpu.matmul %32, %33, %cst_12 {dimension_numbers = #tpu.dot_dimension_numbers<[1], [0], [0], [1], [0, 0, 1, 1], [], []>} : vector<8x2xbf16>, vector<2x512xbf16>, vector<8x512xf32> -> vector<8x512xf32>
    %35 = arith.addf %26, %34 : vector<8x512xf32>
    %c0_13 = arith.constant 0 : index
    %c8_14 = arith.constant 8 : index
    %36 = vector.load %arg2[%c0_13, %c8_14] : memref<17x512xf32, #tpu.memory_space<vmem>>, vector<8x2xf32>
    %37 = arith.truncf %36 : vector<8x2xf32> to vector<8x2xbf16>
    %38 = arith.truncf %0 : vector<2x512xf32> to vector<2x512xbf16>
    %cst_15 = arith.constant dense<0.000000e+00> : vector<8x512xf32>
    %39 = tpu.matmul %37, %38, %cst_15 {dimension_numbers = #tpu.dot_dimension_numbers<[1], [0], [0], [1], [0, 0, 1, 1], [], []>} : vector<8x2xbf16>, vector<2x512xbf16>, vector<8x512xf32> -> vector<8x512xf32>
    %40 = arith.addf %35, %39 : vector<8x512xf32>
    %c511_i32 = arith.constant 511 : i32
    %41 = tpu.dynamic_rotate %0 by %c511_i32 dim 1 : vector<2x512xf32>, i32 -> vector<2x512xf32>
    %c13 = arith.constant 13 : index
    %c0_16 = arith.constant 0 : index
    %42 = vector.load %arg2[%c13, %c0_16] : memref<17x512xf32, #tpu.memory_space<vmem>>, vector<1x512xf32>
    %43 = vector.broadcast %42 : vector<1x512xf32> to vector<2x512xf32>
    %44 = arith.mulf %41, %43 : vector<2x512xf32>
    %c0_17 = arith.constant 0 : index
    %c10_18 = arith.constant 10 : index
    %45 = vector.load %arg2[%c0_17, %c10_18] : memref<17x512xf32, #tpu.memory_space<vmem>>, vector<8x2xf32>
    %46 = arith.truncf %45 : vector<8x2xf32> to vector<8x2xbf16>
    %47 = arith.truncf %44 : vector<2x512xf32> to vector<2x512xbf16>
    %cst_19 = arith.constant dense<0.000000e+00> : vector<8x512xf32>
    %48 = tpu.matmul %46, %47, %cst_19 {dimension_numbers = #tpu.dot_dimension_numbers<[1], [0], [0], [1], [0, 0, 1, 1], [], []>} : vector<8x2xbf16>, vector<2x512xbf16>, vector<8x512xf32> -> vector<8x512xf32>
    %49 = arith.addf %40, %48 : vector<8x512xf32>
    %c497_i32 = arith.constant 497 : i32
    %50 = tpu.dynamic_rotate %0 by %c497_i32 dim 1 : vector<2x512xf32>, i32 -> vector<2x512xf32>
    %c14 = arith.constant 14 : index
    %c0_20 = arith.constant 0 : index
    %51 = vector.load %arg2[%c14, %c0_20] : memref<17x512xf32, #tpu.memory_space<vmem>>, vector<1x512xf32>
    %52 = vector.broadcast %51 : vector<1x512xf32> to vector<2x512xf32>
    %53 = arith.mulf %50, %52 : vector<2x512xf32>
    %c0_21 = arith.constant 0 : index
    %c12 = arith.constant 12 : index
    %54 = vector.load %arg2[%c0_21, %c12] : memref<17x512xf32, #tpu.memory_space<vmem>>, vector<8x2xf32>
    %55 = arith.truncf %54 : vector<8x2xf32> to vector<8x2xbf16>
    %56 = arith.truncf %53 : vector<2x512xf32> to vector<2x512xbf16>
    %cst_22 = arith.constant dense<0.000000e+00> : vector<8x512xf32>
    %57 = tpu.matmul %55, %56, %cst_22 {dimension_numbers = #tpu.dot_dimension_numbers<[1], [0], [0], [1], [0, 0, 1, 1], [], []>} : vector<8x2xbf16>, vector<2x512xbf16>, vector<8x512xf32> -> vector<8x512xf32>
    %58 = arith.addf %49, %57 : vector<8x512xf32>
    %c496_i32 = arith.constant 496 : i32
    %59 = tpu.dynamic_rotate %0 by %c496_i32 dim 1 : vector<2x512xf32>, i32 -> vector<2x512xf32>
    %c15 = arith.constant 15 : index
    %c0_23 = arith.constant 0 : index
    %60 = vector.load %arg2[%c15, %c0_23] : memref<17x512xf32, #tpu.memory_space<vmem>>, vector<1x512xf32>
    %61 = vector.broadcast %60 : vector<1x512xf32> to vector<2x512xf32>
    %62 = arith.mulf %59, %61 : vector<2x512xf32>
    %c0_24 = arith.constant 0 : index
    %c14_25 = arith.constant 14 : index
    %63 = vector.load %arg2[%c0_24, %c14_25] : memref<17x512xf32, #tpu.memory_space<vmem>>, vector<8x2xf32>
    %64 = arith.truncf %63 : vector<8x2xf32> to vector<8x2xbf16>
    %65 = arith.truncf %62 : vector<2x512xf32> to vector<2x512xbf16>
    %cst_26 = arith.constant dense<0.000000e+00> : vector<8x512xf32>
    %66 = tpu.matmul %64, %65, %cst_26 {dimension_numbers = #tpu.dot_dimension_numbers<[1], [0], [0], [1], [0, 0, 1, 1], [], []>} : vector<8x2xbf16>, vector<2x512xbf16>, vector<8x512xf32> -> vector<8x512xf32>
    %67 = arith.addf %58, %66 : vector<8x512xf32>
    %c495_i32 = arith.constant 495 : i32
    %68 = tpu.dynamic_rotate %0 by %c495_i32 dim 1 : vector<2x512xf32>, i32 -> vector<2x512xf32>
    %c16 = arith.constant 16 : index
    %c0_27 = arith.constant 0 : index
    %69 = vector.load %arg2[%c16, %c0_27] : memref<17x512xf32, #tpu.memory_space<vmem>>, vector<1x512xf32>
    %70 = vector.broadcast %69 : vector<1x512xf32> to vector<2x512xf32>
    %71 = arith.mulf %68, %70 : vector<2x512xf32>
    %c0_28 = arith.constant 0 : index
    %c16_29 = arith.constant 16 : index
    %72 = vector.load %arg2[%c0_28, %c16_29] : memref<17x512xf32, #tpu.memory_space<vmem>>, vector<8x2xf32>
    %73 = arith.truncf %72 : vector<8x2xf32> to vector<8x2xbf16>
    %74 = arith.truncf %71 : vector<2x512xf32> to vector<2x512xbf16>
    %cst_30 = arith.constant dense<0.000000e+00> : vector<8x512xf32>
    %75 = tpu.matmul %73, %74, %cst_30 {dimension_numbers = #tpu.dot_dimension_numbers<[1], [0], [0], [1], [0, 0, 1, 1], [], []>} : vector<8x2xbf16>, vector<2x512xbf16>, vector<8x512xf32> -> vector<8x512xf32>
    %76 = arith.addf %67, %75 : vector<8x512xf32>
    %c0_31 = arith.constant 0 : index
    %c90 = arith.constant 90 : index
    %77 = vector.load %arg2[%c0_31, %c90] : memref<17x512xf32, #tpu.memory_space<vmem>>, vector<8x1xf32>
    %c0_32 = arith.constant 0 : index
    %c91 = arith.constant 91 : index
    %78 = vector.load %arg2[%c0_32, %c91] : memref<17x512xf32, #tpu.memory_space<vmem>>, vector<8x1xf32>
    %cst_33 = arith.constant dense<0.000000e+00> : vector<8xf32>
    %79 = vector.multi_reduction <add>, %76, %cst_33 [1] : vector<8x512xf32> to vector<8xf32>
    %80 = vector.shape_cast %79 : vector<8xf32> to vector<8x1xf32>
    %cst_34 = arith.constant 5.120000e+02 : f32
    %81 = vector.broadcast %cst_34 : f32 to vector<8x1xf32>
    %82 = arith.divf %80, %81 : vector<8x1xf32>
    %83 = arith.mulf %76, %76 : vector<8x512xf32>
    %cst_35 = arith.constant dense<0.000000e+00> : vector<8xf32>
    %84 = vector.multi_reduction <add>, %83, %cst_35 [1] : vector<8x512xf32> to vector<8xf32>
    %85 = vector.shape_cast %84 : vector<8xf32> to vector<8x1xf32>
    %cst_36 = arith.constant 5.120000e+02 : f32
    %86 = vector.broadcast %cst_36 : f32 to vector<8x1xf32>
    %87 = arith.divf %85, %86 : vector<8x1xf32>
    %88 = arith.mulf %82, %82 : vector<8x1xf32>
    %89 = arith.subf %87, %88 : vector<8x1xf32>
    %90 = vector.broadcast %82 : vector<8x1xf32> to vector<8x512xf32>
    %91 = arith.subf %76, %90 : vector<8x512xf32>
    %cst_37 = arith.constant 9.99999974E-6 : f32
    %92 = vector.broadcast %cst_37 : f32 to vector<8x1xf32>
    %93 = arith.addf %89, %92 : vector<8x1xf32>
    %94 = math.rsqrt %93 : vector<8x1xf32>
    %95 = vector.broadcast %94 : vector<8x1xf32> to vector<8x512xf32>
    %96 = arith.mulf %91, %95 : vector<8x512xf32>
    %97 = vector.broadcast %77 : vector<8x1xf32> to vector<8x512xf32>
    %98 = arith.mulf %96, %97 : vector<8x512xf32>
    %99 = vector.broadcast %78 : vector<8x1xf32> to vector<8x512xf32>
    %100 = arith.addf %98, %99 : vector<8x512xf32>
    %101 = math.tanh %100 : vector<8x512xf32>
    %c17_i32_38 = arith.constant 17 : i32
    %102 = tpu.dynamic_rotate %101 by %c17_i32_38 dim 1 : vector<8x512xf32>, i32 -> vector<8x512xf32>
    %c8_39 = arith.constant 8 : index
    %c0_40 = arith.constant 0 : index
    %103 = vector.load %arg2[%c8_39, %c0_40] : memref<17x512xf32, #tpu.memory_space<vmem>>, vector<1x512xf32>
    %104 = vector.broadcast %103 : vector<1x512xf32> to vector<8x512xf32>
    %105 = arith.mulf %102, %104 : vector<8x512xf32>
    %c0_41 = arith.constant 0 : index
    %c18 = arith.constant 18 : index
    %106 = vector.load %arg2[%c0_41, %c18] : memref<17x512xf32, #tpu.memory_space<vmem>>, vector<2x8xf32>
    %107 = arith.truncf %106 : vector<2x8xf32> to vector<2x8xbf16>
    %108 = arith.truncf %105 : vector<8x512xf32> to vector<8x512xbf16>
    %cst_42 = arith.constant dense<0.000000e+00> : vector<2x512xf32>
    %109 = tpu.matmul %107, %108, %cst_42 {dimension_numbers = #tpu.dot_dimension_numbers<[1], [0], [0], [1], [0, 0, 1, 1], [], []>} : vector<2x8xbf16>, vector<8x512xbf16>, vector<2x512xf32> -> vector<2x512xf32>
    %c16_i32_43 = arith.constant 16 : i32
    %110 = tpu.dynamic_rotate %101 by %c16_i32_43 dim 1 : vector<8x512xf32>, i32 -> vector<8x512xf32>
    %c9_44 = arith.constant 9 : index
    %c0_45 = arith.constant 0 : index
    %111 = vector.load %arg2[%c9_44, %c0_45] : memref<17x512xf32, #tpu.memory_space<vmem>>, vector<1x512xf32>
    %112 = vector.broadcast %111 : vector<1x512xf32> to vector<8x512xf32>
    %113 = arith.mulf %110, %112 : vector<8x512xf32>
    %c0_46 = arith.constant 0 : index
    %c26 = arith.constant 26 : index
    %114 = vector.load %arg2[%c0_46, %c26] : memref<17x512xf32, #tpu.memory_space<vmem>>, vector<2x8xf32>
    %115 = arith.truncf %114 : vector<2x8xf32> to vector<2x8xbf16>
    %116 = arith.truncf %113 : vector<8x512xf32> to vector<8x512xbf16>
    %cst_47 = arith.constant dense<0.000000e+00> : vector<2x512xf32>
    %117 = tpu.matmul %115, %116, %cst_47 {dimension_numbers = #tpu.dot_dimension_numbers<[1], [0], [0], [1], [0, 0, 1, 1], [], []>} : vector<2x8xbf16>, vector<8x512xbf16>, vector<2x512xf32> -> vector<2x512xf32>
    %118 = arith.addf %109, %117 : vector<2x512xf32>
    %c15_i32_48 = arith.constant 15 : i32
    %119 = tpu.dynamic_rotate %101 by %c15_i32_48 dim 1 : vector<8x512xf32>, i32 -> vector<8x512xf32>
    %c10_49 = arith.constant 10 : index
    %c0_50 = arith.constant 0 : index
    %120 = vector.load %arg2[%c10_49, %c0_50] : memref<17x512xf32, #tpu.memory_space<vmem>>, vector<1x512xf32>
    %121 = vector.broadcast %120 : vector<1x512xf32> to vector<8x512xf32>
    %122 = arith.mulf %119, %121 : vector<8x512xf32>
    %c0_51 = arith.constant 0 : index
    %c34 = arith.constant 34 : index
    %123 = vector.load %arg2[%c0_51, %c34] : memref<17x512xf32, #tpu.memory_space<vmem>>, vector<2x8xf32>
    %124 = arith.truncf %123 : vector<2x8xf32> to vector<2x8xbf16>
    %125 = arith.truncf %122 : vector<8x512xf32> to vector<8x512xbf16>
    %cst_52 = arith.constant dense<0.000000e+00> : vector<2x512xf32>
    %126 = tpu.matmul %124, %125, %cst_52 {dimension_numbers = #tpu.dot_dimension_numbers<[1], [0], [0], [1], [0, 0, 1, 1], [], []>} : vector<2x8xbf16>, vector<8x512xbf16>, vector<2x512xf32> -> vector<2x512xf32>
    %127 = arith.addf %118, %126 : vector<2x512xf32>
    %c1_i32_53 = arith.constant 1 : i32
    %128 = tpu.dynamic_rotate %101 by %c1_i32_53 dim 1 : vector<8x512xf32>, i32 -> vector<8x512xf32>
    %c11_54 = arith.constant 11 : index
    %c0_55 = arith.constant 0 : index
    %129 = vector.load %arg2[%c11_54, %c0_55] : memref<17x512xf32, #tpu.memory_space<vmem>>, vector<1x512xf32>
    %130 = vector.broadcast %129 : vector<1x512xf32> to vector<8x512xf32>
    %131 = arith.mulf %128, %130 : vector<8x512xf32>
    %c0_56 = arith.constant 0 : index
    %c42 = arith.constant 42 : index
    %132 = vector.load %arg2[%c0_56, %c42] : memref<17x512xf32, #tpu.memory_space<vmem>>, vector<2x8xf32>
    %133 = arith.truncf %132 : vector<2x8xf32> to vector<2x8xbf16>
    %134 = arith.truncf %131 : vector<8x512xf32> to vector<8x512xbf16>
    %cst_57 = arith.constant dense<0.000000e+00> : vector<2x512xf32>
    %135 = tpu.matmul %133, %134, %cst_57 {dimension_numbers = #tpu.dot_dimension_numbers<[1], [0], [0], [1], [0, 0, 1, 1], [], []>} : vector<2x8xbf16>, vector<8x512xbf16>, vector<2x512xf32> -> vector<2x512xf32>
    %136 = arith.addf %127, %135 : vector<2x512xf32>
    %c0_58 = arith.constant 0 : index
    %c50 = arith.constant 50 : index
    %137 = vector.load %arg2[%c0_58, %c50] : memref<17x512xf32, #tpu.memory_space<vmem>>, vector<2x8xf32>
    %138 = arith.truncf %137 : vector<2x8xf32> to vector<2x8xbf16>
    %139 = arith.truncf %101 : vector<8x512xf32> to vector<8x512xbf16>
    %cst_59 = arith.constant dense<0.000000e+00> : vector<2x512xf32>
    %140 = tpu.matmul %138, %139, %cst_59 {dimension_numbers = #tpu.dot_dimension_numbers<[1], [0], [0], [1], [0, 0, 1, 1], [], []>} : vector<2x8xbf16>, vector<8x512xbf16>, vector<2x512xf32> -> vector<2x512xf32>
    %141 = arith.addf %136, %140 : vector<2x512xf32>
    %c511_i32_60 = arith.constant 511 : i32
    %142 = tpu.dynamic_rotate %101 by %c511_i32_60 dim 1 : vector<8x512xf32>, i32 -> vector<8x512xf32>
    %c13_61 = arith.constant 13 : index
    %c0_62 = arith.constant 0 : index
    %143 = vector.load %arg2[%c13_61, %c0_62] : memref<17x512xf32, #tpu.memory_space<vmem>>, vector<1x512xf32>
    %144 = vector.broadcast %143 : vector<1x512xf32> to vector<8x512xf32>
    %145 = arith.mulf %142, %144 : vector<8x512xf32>
    %c0_63 = arith.constant 0 : index
    %c58 = arith.constant 58 : index
    %146 = vector.load %arg2[%c0_63, %c58] : memref<17x512xf32, #tpu.memory_space<vmem>>, vector<2x8xf32>
    %147 = arith.truncf %146 : vector<2x8xf32> to vector<2x8xbf16>
    %148 = arith.truncf %145 : vector<8x512xf32> to vector<8x512xbf16>
    %cst_64 = arith.constant dense<0.000000e+00> : vector<2x512xf32>
    %149 = tpu.matmul %147, %148, %cst_64 {dimension_numbers = #tpu.dot_dimension_numbers<[1], [0], [0], [1], [0, 0, 1, 1], [], []>} : vector<2x8xbf16>, vector<8x512xbf16>, vector<2x512xf32> -> vector<2x512xf32>
    %150 = arith.addf %141, %149 : vector<2x512xf32>
    %c497_i32_65 = arith.constant 497 : i32
    %151 = tpu.dynamic_rotate %101 by %c497_i32_65 dim 1 : vector<8x512xf32>, i32 -> vector<8x512xf32>
    %c14_66 = arith.constant 14 : index
    %c0_67 = arith.constant 0 : index
    %152 = vector.load %arg2[%c14_66, %c0_67] : memref<17x512xf32, #tpu.memory_space<vmem>>, vector<1x512xf32>
    %153 = vector.broadcast %152 : vector<1x512xf32> to vector<8x512xf32>
    %154 = arith.mulf %151, %153 : vector<8x512xf32>
    %c0_68 = arith.constant 0 : index
    %c66 = arith.constant 66 : index
    %155 = vector.load %arg2[%c0_68, %c66] : memref<17x512xf32, #tpu.memory_space<vmem>>, vector<2x8xf32>
    %156 = arith.truncf %155 : vector<2x8xf32> to vector<2x8xbf16>
    %157 = arith.truncf %154 : vector<8x512xf32> to vector<8x512xbf16>
    %cst_69 = arith.constant dense<0.000000e+00> : vector<2x512xf32>
    %158 = tpu.matmul %156, %157, %cst_69 {dimension_numbers = #tpu.dot_dimension_numbers<[1], [0], [0], [1], [0, 0, 1, 1], [], []>} : vector<2x8xbf16>, vector<8x512xbf16>, vector<2x512xf32> -> vector<2x512xf32>
    %159 = arith.addf %150, %158 : vector<2x512xf32>
    %c496_i32_70 = arith.constant 496 : i32
    %160 = tpu.dynamic_rotate %101 by %c496_i32_70 dim 1 : vector<8x512xf32>, i32 -> vector<8x512xf32>
    %c15_71 = arith.constant 15 : index
    %c0_72 = arith.constant 0 : index
    %161 = vector.load %arg2[%c15_71, %c0_72] : memref<17x512xf32, #tpu.memory_space<vmem>>, vector<1x512xf32>
    %162 = vector.broadcast %161 : vector<1x512xf32> to vector<8x512xf32>
    %163 = arith.mulf %160, %162 : vector<8x512xf32>
    %c0_73 = arith.constant 0 : index
    %c74 = arith.constant 74 : index
    %164 = vector.load %arg2[%c0_73, %c74] : memref<17x512xf32, #tpu.memory_space<vmem>>, vector<2x8xf32>
    %165 = arith.truncf %164 : vector<2x8xf32> to vector<2x8xbf16>
    %166 = arith.truncf %163 : vector<8x512xf32> to vector<8x512xbf16>
    %cst_74 = arith.constant dense<0.000000e+00> : vector<2x512xf32>
    %167 = tpu.matmul %165, %166, %cst_74 {dimension_numbers = #tpu.dot_dimension_numbers<[1], [0], [0], [1], [0, 0, 1, 1], [], []>} : vector<2x8xbf16>, vector<8x512xbf16>, vector<2x512xf32> -> vector<2x512xf32>
    %168 = arith.addf %159, %167 : vector<2x512xf32>
    %c495_i32_75 = arith.constant 495 : i32
    %169 = tpu.dynamic_rotate %101 by %c495_i32_75 dim 1 : vector<8x512xf32>, i32 -> vector<8x512xf32>
    %c16_76 = arith.constant 16 : index
    %c0_77 = arith.constant 0 : index
    %170 = vector.load %arg2[%c16_76, %c0_77] : memref<17x512xf32, #tpu.memory_space<vmem>>, vector<1x512xf32>
    %171 = vector.broadcast %170 : vector<1x512xf32> to vector<8x512xf32>
    %172 = arith.mulf %169, %171 : vector<8x512xf32>
    %c0_78 = arith.constant 0 : index
    %c82 = arith.constant 82 : index
    %173 = vector.load %arg2[%c0_78, %c82] : memref<17x512xf32, #tpu.memory_space<vmem>>, vector<2x8xf32>
    %174 = arith.truncf %173 : vector<2x8xf32> to vector<2x8xbf16>
    %175 = arith.truncf %172 : vector<8x512xf32> to vector<8x512xbf16>
    %cst_79 = arith.constant dense<0.000000e+00> : vector<2x512xf32>
    %176 = tpu.matmul %174, %175, %cst_79 {dimension_numbers = #tpu.dot_dimension_numbers<[1], [0], [0], [1], [0, 0, 1, 1], [], []>} : vector<2x8xbf16>, vector<8x512xbf16>, vector<2x512xf32> -> vector<2x512xf32>
    %177 = arith.addf %168, %176 : vector<2x512xf32>
    %c0_80 = arith.constant 0 : index
    %c92 = arith.constant 92 : index
    %178 = vector.load %arg2[%c0_80, %c92] : memref<17x512xf32, #tpu.memory_space<vmem>>, vector<2x1xf32>
    %c0_81 = arith.constant 0 : index
    %c93 = arith.constant 93 : index
    %179 = vector.load %arg2[%c0_81, %c93] : memref<17x512xf32, #tpu.memory_space<vmem>>, vector<2x1xf32>
    %cst_82 = arith.constant dense<0.000000e+00> : vector<2xf32>
    %180 = vector.multi_reduction <add>, %177, %cst_82 [1] : vector<2x512xf32> to vector<2xf32>
    %181 = vector.shape_cast %180 : vector<2xf32> to vector<2x1xf32>
    %cst_83 = arith.constant 5.120000e+02 : f32
    %182 = vector.broadcast %cst_83 : f32 to vector<2x1xf32>
    %183 = arith.divf %181, %182 : vector<2x1xf32>
    %184 = arith.mulf %177, %177 : vector<2x512xf32>
    %cst_84 = arith.constant dense<0.000000e+00> : vector<2xf32>
    %185 = vector.multi_reduction <add>, %184, %cst_84 [1] : vector<2x512xf32> to vector<2xf32>
    %186 = vector.shape_cast %185 : vector<2xf32> to vector<2x1xf32>
    %cst_85 = arith.constant 5.120000e+02 : f32
    %187 = vector.broadcast %cst_85 : f32 to vector<2x1xf32>
    %188 = arith.divf %186, %187 : vector<2x1xf32>
    %189 = arith.mulf %183, %183 : vector<2x1xf32>
    %190 = arith.subf %188, %189 : vector<2x1xf32>
    %191 = vector.broadcast %183 : vector<2x1xf32> to vector<2x512xf32>
    %192 = arith.subf %177, %191 : vector<2x512xf32>
    %cst_86 = arith.constant 9.99999974E-6 : f32
    %193 = vector.broadcast %cst_86 : f32 to vector<2x1xf32>
    %194 = arith.addf %190, %193 : vector<2x1xf32>
    %195 = math.rsqrt %194 : vector<2x1xf32>
    %196 = vector.broadcast %195 : vector<2x1xf32> to vector<2x512xf32>
    %197 = arith.mulf %192, %196 : vector<2x512xf32>
    %198 = vector.broadcast %178 : vector<2x1xf32> to vector<2x512xf32>
    %199 = arith.mulf %197, %198 : vector<2x512xf32>
    %200 = vector.broadcast %179 : vector<2x1xf32> to vector<2x512xf32>
    %201 = arith.addf %199, %200 : vector<2x512xf32>
    %202 = math.tanh %201 : vector<2x512xf32>
    %c0_87 = arith.constant 0 : index
    %c0_88 = arith.constant 0 : index
    %203 = vector.load %arg3[%c0_87, %c0_88] : memref<2x512xf32, #tpu.memory_space<vmem>>, vector<2x512xf32>
    tpu.vector_store %arg3[%c0_87, %c0_88], %202 {strides = array<i32>} : memref<2x512xf32, #tpu.memory_space<vmem>>, vector<2x512xf32>,
    return
  }
  func.func @transform_0(%arg0: i32) -> (i32, i32) {
    %c0_i32 = arith.constant 0 : i32
    %c0_i32_0 = arith.constant 0 : i32
    %c0_i32_1 = arith.constant 0 : i32
    return %c0_i32, %c0_i32_0 : i32, i32
  }
  func.func @transform_1(%arg0: i32) -> (i32, i32) {
    %c0_i32 = arith.constant 0 : i32
    %c0_i32_0 = arith.constant 0 : i32
    %c0_i32_1 = arith.constant 0 : i32
    return %c0_i32, %c0_i32_0 : i32, i32
  }
  func.func @transform_2(%arg0: i32) -> (i32, i32) {
    %c0_i32 = arith.constant 0 : i32
    %c0_i32_0 = arith.constant 0 : i32
    %c0_i32_1 = arith.constant 0 : i32
    return %c0_i32, %c0_i32_0 : i32, i32
  }
}

</mosaic_0001>

<llo_original>
// kernel: tpu_custom_call.1
$region0: #{tpu_custom_call.1}
  #allocation0 [shape = 'u32[]', space=smem, size = 0x4, offset = 0x4, fixed_abs, tag = 'smem constant byte address 0x4 - core index']
  #allocation1 [shape = 'u32[144,128]{1,0:T(1,128)}', space=vmem, size = 0x12000, scoped, tag = 'internal scratch']
  %s0 = inlined_call_operand.hbm [shape: f32[2,512], index: 0, kind: input, shape index: {}]
  %s1 = inlined_call_operand.hbm [shape: f32[17,512], index: 1, kind: input, shape index: {}]
  %s2 = inlined_call_operand.hbm [shape: f32[2,512], index: 2, kind: output, shape index: {}]
  %s3 = sld [smem:[#allocation0]]
  $region26: #{tpu_custom_call.1} parent=0
    _
  %s5 = ssub.s32 1, %s3
  %s6 = scalar_select 0, %s5, %s3
  $region1: #{tpu_custom_call.1} parent=0
    #allocation2 [shape = 'u8[4096]{0}', space=vmem, size = 0x1000, scoped, tag = 'input window, operand 0, single buffered']
    #allocation3 [shape = 's32[1]{0}', space=sflag, size = 0x4, scoped, tag = 'scoped memory for tpu_custom_call.1']
    #allocation4 [shape = 's32[1]{0}', space=sflag, size = 0x4, scoped, tag = 'scoped memory for tpu_custom_call.1']
    #allocation5 [shape = 'u8[49152]{0}', space=vmem, size = 0xc000, scoped, tag = 'input window, operand 1, single buffered']
    #allocation6 [shape = 's32[1]{0}', space=sflag, size = 0x4, scoped, tag = 'scoped memory for tpu_custom_call.1']
    #allocation7 [shape = 'u8[4096]{0}', space=vmem, size = 0x1000, scoped, tag = 'output window, operand 0, single buffered']
    %7 = vsyncpa [#allocation3], 0
    %8 = vsyncpa [#allocation6], 0
    %9 = vsyncpa [#allocation4], 0
    // Predicated region
    $region2: #{tpu_custom_call.1} parent=1 // pred_check
      _
    $region3: #{tpu_custom_call.1} parent=1 // pred_check_branch
      %11 = sbr.rel (0) target = $region5
    $region4: #{tpu_custom_call.1} parent=1 // pred_region
      %s13 = ssub.s32 128, 128
      %14 = vsyncadd [#allocation3], %s13
      %s16 = sshll.u32 [#allocation2], 4
      %s17 = int_to_ptr.vmem [resolvable:$true] %s16
      %19 = dma.hbm_to_vmem [thread:$0]  %s0, 128, %s17, [#allocation3]
    $region5: #{tpu_custom_call.1} parent=1 // pred_fallthru
      _
    // Predicated region
    $region6: #{tpu_custom_call.1} parent=1 // pred_check
      _
    $region7: #{tpu_custom_call.1} parent=1 // pred_check_branch
      %21 = sbr.rel (0) target = $region9
    $region8: #{tpu_custom_call.1} parent=1 // pred_region
      %s23 = ssub.s32 1536, 1536
      %24 = vsyncadd [#allocation6], %s23
      %s25 = sshll.u32 [#allocation5], 4
      %s26 = int_to_ptr.vmem [resolvable:$true] %s25
      %31 = dma.hbm_to_vmem [thread:$0]  %s1, 1536, %s26, [#allocation6], 512, 512, 32
    $region9: #{tpu_custom_call.1} parent=1 // pred_fallthru
      _
    // Predicated region
    $region10: #{tpu_custom_call.1} parent=1 // pred_check
      _
    $region11: #{tpu_custom_call.1} parent=1 // pred_check_branch
      %33 = sbr.rel (0) target = $region13
    $region12: #{tpu_custom_call.1} parent=1 // pred_region
      %34 = dma.done [#allocation3], 128
    $region13: #{tpu_custom_call.1} parent=1 // pred_fallthru
      _
    // Predicated region
    $region14: #{tpu_custom_call.1} parent=1 // pred_check
      _
    $region15: #{tpu_custom_call.1} parent=1 // pred_check_branch
      %36 = sbr.rel (0) target = $region17
    $region16: #{tpu_custom_call.1} parent=1 // pred_region
      %37 = dma.done [#allocation6], 1536
    $region17: #{tpu_custom_call.1} parent=1 // pred_fallthru
      _
    %v39 = vld [vmem:[#allocation2] sm:$0xff]
    %v41 = vcombine.high %v39, %v39
    %v43 = vunpack.c.l.s4 1983009808
    %v44 = vunpack.c.0.s8 %v43
    %v45 = vlaneseq
    %v46 = vshrl.u32 %v45, 7
    %v47 = vsub.s32 %v44, %v46
    %v48 = vrot.slane %v39, %v47
    %v50 = vunpack.c.l.s4 1983009808
    %v51 = vunpack.c.0.s8 %v50
    %v52 = vlaneseq
    %v53 = vshrl.u32 %v52, 7
    %v54 = vsub.s32 %v51, %v53
    %v55 = vrot.slane %v41, %v54
    %v56 = vcombine.high %v48, %v48
    %v57 = vcombine.high %v55, %v55
    %62 = vrot.lane.b32.xlu0 %v48, 17
    %v63 = vpop.permute.xlu0 %62
    %64 = vrot.lane.b32.xlu0 %v56, 17
    %v65 = vpop.permute.xlu0 %64
    %66 = vrot.lane.b32.xlu0 %v55, 17
    %v67 = vpop.permute.xlu0 %66
    %68 = vrot.lane.b32.xlu0 %v57, 17
    %v69 = vpop.permute.xlu0 %68
    %v70 = vlaneseq
    %v71 = vand.u32 %v70, 127
    %vm72 = vcmp.lt.s32.totalorder %v71, 17
    %v73 = vsel %vm72, %v67, %v69
    %v74 = vsel %vm72, %v65, %v67
    %v75 = vsel %vm72, %v63, %v65
    %v76 = vsel %vm72, %v69, %v63
    %s77 = scalar_lea.vmem [#allocation5], 32
    %v78 = vld [vmem:[%s77] ss:$8 sm:$0xf]
    %v80 = vlaneseq
    %v81 = vshrl.u32 %v80, 7
    %v82 = vsub.s32 0, %v81
    %v83 = vrot.slane %v78, %v82
    %v84 = vlaneseq
    %v85 = vshrl.u32 %v84, 7
    %v86 = vsub.s32 1, %v85
    %v87 = vrot.slane %v78, %v86
    %v88 = vlaneseq
    %v89 = vshrl.u32 %v88, 7
    %v90 = vsub.s32 2, %v89
    %v91 = vrot.slane %v78, %v90
    %v92 = vlaneseq
    %v93 = vshrl.u32 %v92, 7
    %v94 = vsub.s32 3, %v93
    %v95 = vrot.slane %v78, %v94
    %v100 = vmul.f32 %v76, %v83
    %v101 = vmul.f32 %v75, %v87
    %v102 = vmul.f32 %v74, %v91
    %v103 = vmul.f32 %v73, %v95
    %v104 = vld [vmem:[#allocation5] sm:$0xff]
    %v105 = vpack.c.bf16 %v104, %v104
    %v106 = vpack.c.bf16 %v100, %v100
    %v107 = vpack.c.bf16 %v101, %v101
    %v108 = vpack.c.bf16 %v102, %v102
    %v109 = vpack.c.bf16 %v103, %v103
    %110 = vrot.lane.b32.xlu0 %v48, 16
    %v111 = vpop.permute.xlu0 %110
    %112 = vrot.lane.b32.xlu0 %v56, 16
    %v113 = vpop.permute.xlu0 %112
    %114 = vrot.lane.b32.xlu0 %v55, 16
    %v115 = vpop.permute.xlu0 %114
    %116 = vrot.lane.b32.xlu0 %v57, 16
    %v117 = vpop.permute.xlu0 %116
    %vm118 = vcmp.lt.s32.totalorder %v71, 16
    %v119 = vsel %vm118, %v115, %v117
    %v120 = vsel %vm118, %v113, %v115
    %v121 = vsel %vm118, %v111, %v113
    %v122 = vsel %vm118, %v117, %v111
    %s123 = scalar_lea.vmem [#allocation5], 33
    %v124 = vld [vmem:[%s123] ss:$8 sm:$0xf]
    %v126 = vlaneseq
    %v127 = vshrl.u32 %v126, 7
    %v128 = vsub.s32 0, %v127
    %v129 = vrot.slane %v124, %v128
    %v130 = vlaneseq
    %v131 = vshrl.u32 %v130, 7
    %v132 = vsub.s32 1, %v131
    %v133 = vrot.slane %v124, %v132
    %v134 = vlaneseq
    %v135 = vshrl.u32 %v134, 7
    %v136 = vsub.s32 2, %v135
    %v137 = vrot.slane %v124, %v136
    %v138 = vlaneseq
    %v139 = vshrl.u32 %v138, 7
    %v140 = vsub.s32 3, %v139
    %v141 = vrot.slane %v124, %v140
    %v146 = vmul.f32 %v122, %v129
    %v147 = vmul.f32 %v121, %v133
    %v148 = vmul.f32 %v120, %v137
    %v149 = vmul.f32 %v119, %v141
    %v150 = vpack.c.bf16 %v146, %v146
    %v151 = vpack.c.bf16 %v147, %v147
    %v152 = vpack.c.bf16 %v148, %v148
    %v153 = vpack.c.bf16 %v149, %v149
    %155 = vrot.lane.b32.xlu0 %v105, 126
    %v156 = vpop.permute.xlu0 %155
    %vm157 = vcmask 15360
    %v159 = vsel %vm157, %v156, 0
    %vm161 = vcmask 1040384
    %v163 = vsel %vm161, %v150, 0
    %v166 = vsel %vm161, %v151, 0
    %v169 = vsel %vm161, %v152, 0
    %v172 = vsel %vm161, %v153, 0
    %174 = vmatprep.subr.bf16.mxu0 0
    %175 = vmatpush1.bf16.msra.mxu0 0
    %176 = vmatprep.subr.bf16.mxu0 0
    %177 = vmatpush1.bf16.msra.mxu0 0
    %178 = vmatprep.subr.bf16.mxu0 0
    %179 = vmatpush1.bf16.msra.mxu0 0
    %180 = vmatprep.subr.bf16.mxu0 0
    %181 = vmatpush1.bf16.msra.mxu0 0
    %182 = vmatprep.subr.bf16.mxu0 0
    %183 = vmatpush1.bf16.msra.mxu0 0
    %184 = vmatprep.subr.bf16.mxu0 0
    %185 = vmatpush1.bf16.msra.mxu0 0
    %186 = vmatprep.subr.bf16.mxu0 0
    %187 = vmatpush1.bf16.msra.mxu0 0
    %188 = vmatprep.subr.bf16.mxu0 %v166
    %189 = vmatpush1.bf16.msra.mxu0 %v163
    %190 = vmatprep.subr.bf16.mxu0 0
    %191 = vmatpush2.bf16.msra.mxu0 0
    %192 = vmatprep.subr.bf16.mxu0 0
    %193 = vmatpush2.bf16.msra.mxu0 0
    %194 = vmatprep.subr.bf16.mxu0 0
    %195 = vmatpush2.bf16.msra.mxu0 0
    %196 = vmatprep.subr.bf16.mxu0 0
    %197 = vmatpush2.bf16.msra.mxu0 0
    %198 = vmatprep.subr.bf16.mxu0 0
    %199 = vmatpush2.bf16.msra.mxu0 0
    %200 = vmatprep.subr.bf16.mxu0 0
    %201 = vmatpush2.bf16.msra.mxu0 0
    %202 = vmatprep.subr.bf16.mxu0 0
    %203 = vmatpush2.bf16.msra.mxu0 0
    %204 = vmatprep.subr.bf16.mxu0 0
    %205 = vmatpush2.bf16.msra.mxu0 0
    %206 = vmatprep.mubr.bf16.mxu0 0
    %207 = vmatmul.mubr.bf16.gmra.mxu0 %v159
    %v208 = vpop.f32.mrf.mxu0
    %v209 = vadd.f32 0.0, %v208
    %v210 = vpop.f32.mrf.mxu0
    %v211 = vadd.f32 0.0, %v210
    %v212 = vpop.f32.mrf.mxu0
    %v213 = vpop.f32.mrf.mxu0
    %214 = vdwg.mxu0
    %215 = vmatprep.subr.bf16.mxu0 0
    %216 = vmatpush1.bf16.msra.mxu0 0
    %217 = vmatprep.subr.bf16.mxu0 0
    %218 = vmatpush1.bf16.msra.mxu0 0
    %219 = vmatprep.subr.bf16.mxu0 0
    %220 = vmatpush1.bf16.msra.mxu0 0
    %221 = vmatprep.subr.bf16.mxu0 0
    %222 = vmatpush1.bf16.msra.mxu0 0
    %223 = vmatprep.subr.bf16.mxu0 0
    %224 = vmatpush1.bf16.msra.mxu0 0
    %225 = vmatprep.subr.bf16.mxu0 0
    %226 = vmatpush1.bf16.msra.mxu0 0
    %227 = vmatprep.subr.bf16.mxu0 0
    %228 = vmatpush1.bf16.msra.mxu0 0
    %229 = vmatprep.subr.bf16.mxu0 %v172
    %230 = vmatpush1.bf16.msra.mxu0 %v169
    %231 = vmatprep.subr.bf16.mxu0 0
    %232 = vmatpush2.bf16.msra.mxu0 0
    %233 = vmatprep.subr.bf16.mxu0 0
    %234 = vmatpush2.bf16.msra.mxu0 0
    %235 = vmatprep.subr.bf16.mxu0 0
    %236 = vmatpush2.bf16.msra.mxu0 0
    %237 = vmatprep.subr.bf16.mxu0 0
    %238 = vmatpush2.bf16.msra.mxu0 0
    %239 = vmatprep.subr.bf16.mxu0 0
    %240 = vmatpush2.bf16.msra.mxu0 0
    %241 = vmatprep.subr.bf16.mxu0 0
    %242 = vmatpush2.bf16.msra.mxu0 0
    %243 = vmatprep.subr.bf16.mxu0 0
    %244 = vmatpush2.bf16.msra.mxu0 0
    %245 = vmatprep.subr.bf16.mxu0 0
    %246 = vmatpush2.bf16.msra.mxu0 0
    %247 = vmatprep.mubr.bf16.mxu0 0
    %248 = vmatmul.mubr.bf16.gmra.mxu0 %v159
    %v249 = vpop.f32.mrf.mxu0
    %v250 = vadd.f32 0.0, %v249
    %v251 = vpop.f32.mrf.mxu0
    %v252 = vadd.f32 0.0, %v251
    %v253 = vpop.f32.mrf.mxu0
    %v254 = vpop.f32.mrf.mxu0
    %255 = vdwg.mxu0
    %v257 = vsel %vm157, %v105, 0
    %v260 = vsel %vm161, %v106, 0
    %v263 = vsel %vm161, %v107, 0
    %v266 = vsel %vm161, %v108, 0
    %v269 = vsel %vm161, %v109, 0
    %271 = vmatprep.subr.bf16.mxu0 0
    %272 = vmatpush1.bf16.msra.mxu0 0
    %273 = vmatprep.subr.bf16.mxu0 0
    %274 = vmatpush1.bf16.msra.mxu0 0
    %275 = vmatprep.subr.bf16.mxu0 0
    %276 = vmatpush1.bf16.msra.mxu0 0
    %277 = vmatprep.subr.bf16.mxu0 0
    %278 = vmatpush1.bf16.msra.mxu0 0
    %279 = vmatprep.subr.bf16.mxu0 0
    %280 = vmatpush1.bf16.msra.mxu0 0
    %281 = vmatprep.subr.bf16.mxu0 0
    %282 = vmatpush1.bf16.msra.mxu0 0
    %283 = vmatprep.subr.bf16.mxu0 0
    %284 = vmatpush1.bf16.msra.mxu0 0
    %285 = vmatprep.subr.bf16.mxu0 %v263
    %286 = vmatpush1.bf16.msra.mxu0 %v260
    %287 = vmatprep.subr.bf16.mxu0 0
    %288 = vmatpush2.bf16.msra.mxu0 0
    %289 = vmatprep.subr.bf16.mxu0 0
    %290 = vmatpush2.bf16.msra.mxu0 0
    %291 = vmatprep.subr.bf16.mxu0 0
    %292 = vmatpush2.bf16.msra.mxu0 0
    %293 = vmatprep.subr.bf16.mxu0 0
    %294 = vmatpush2.bf16.msra.mxu0 0
    %295 = vmatprep.subr.bf16.mxu0 0
    %296 = vmatpush2.bf16.msra.mxu0 0
    %297 = vmatprep.subr.bf16.mxu0 0
    %298 = vmatpush2.bf16.msra.mxu0 0
    %299 = vmatprep.subr.bf16.mxu0 0
    %300 = vmatpush2.bf16.msra.mxu0 0
    %301 = vmatprep.subr.bf16.mxu0 0
    %302 = vmatpush2.bf16.msra.mxu0 0
    %303 = vmatprep.mubr.bf16.mxu0 0
    %304 = vmatmul.mubr.bf16.gmra.mxu0 %v257
    %v305 = vpop.f32.mrf.mxu0
    %v306 = vadd.f32 %v209, %v305
    %v307 = vpop.f32.mrf.mxu0
    %v308 = vadd.f32 %v211, %v307
    %v309 = vpop.f32.mrf.mxu0
    %v310 = vpop.f32.mrf.mxu0
    %311 = vdwg.mxu0
    %312 = vmatprep.subr.bf16.mxu0 0
    %313 = vmatpush1.bf16.msra.mxu0 0
    %314 = vmatprep.subr.bf16.mxu0 0
    %315 = vmatpush1.bf16.msra.mxu0 0
    %316 = vmatprep.subr.bf16.mxu0 0
    %317 = vmatpush1.bf16.msra.mxu0 0
    %318 = vmatprep.subr.bf16.mxu0 0
    %319 = vmatpush1.bf16.msra.mxu0 0
    %320 = vmatprep.subr.bf16.mxu0 0
    %321 = vmatpush1.bf16.msra.mxu0 0
    %322 = vmatprep.subr.bf16.mxu0 0
    %323 = vmatpush1.bf16.msra.mxu0 0
    %324 = vmatprep.subr.bf16.mxu0 0
    %325 = vmatpush1.bf16.msra.mxu0 0
    %326 = vmatprep.subr.bf16.mxu0 %v269
    %327 = vmatpush1.bf16.msra.mxu0 %v266
    %328 = vmatprep.subr.bf16.mxu0 0
    %329 = vmatpush2.bf16.msra.mxu0 0
    %330 = vmatprep.subr.bf16.mxu0 0
    %331 = vmatpush2.bf16.msra.mxu0 0
    %332 = vmatprep.subr.bf16.mxu0 0
    %333 = vmatpush2.bf16.msra.mxu0 0
    %334 = vmatprep.subr.bf16.mxu0 0
    %335 = vmatpush2.bf16.msra.mxu0 0
    %336 = vmatprep.subr.bf16.mxu0 0
    %337 = vmatpush2.bf16.msra.mxu0 0
    %338 = vmatprep.subr.bf16.mxu0 0
    %339 = vmatpush2.bf16.msra.mxu0 0
    %340 = vmatprep.subr.bf16.mxu0 0
    %341 = vmatpush2.bf16.msra.mxu0 0
    %342 = vmatprep.subr.bf16.mxu0 0
    %343 = vmatpush2.bf16.msra.mxu0 0
    %344 = vmatprep.mubr.bf16.mxu0 0
    %345 = vmatmul.mubr.bf16.gmra.mxu0 %v257
    %v346 = vpop.f32.mrf.mxu0
    %v347 = vadd.f32 %v250, %v346
    %v348 = vpop.f32.mrf.mxu0
    %v349 = vadd.f32 %v252, %v348
    %v350 = vpop.f32.mrf.mxu0
    %v351 = vpop.f32.mrf.mxu0
    %352 = vdwg.mxu0
    %353 = vrot.lane.b32.xlu0 %v48, 15
    %v354 = vpop.permute.xlu0 %353
    %355 = vrot.lane.b32.xlu0 %v56, 15
    %v356 = vpop.permute.xlu0 %355
    %357 = vrot.lane.b32.xlu0 %v55, 15
    %v358 = vpop.permute.xlu0 %357
    %359 = vrot.lane.b32.xlu0 %v57, 15
    %v360 = vpop.permute.xlu0 %359
    %vm361 = vcmp.lt.s32.totalorder %v71, 15
    %v362 = vsel %vm361, %v358, %v360
    %v363 = vsel %vm361, %v356, %v358
    %v364 = vsel %vm361, %v354, %v356
    %v365 = vsel %vm361, %v360, %v354
    %s366 = scalar_lea.vmem [#allocation5], 34
    %v367 = vld [vmem:[%s366] ss:$8 sm:$0xf]
    %v369 = vlaneseq
    %v370 = vshrl.u32 %v369, 7
    %v371 = vsub.s32 0, %v370
    %v372 = vrot.slane %v367, %v371
    %v373 = vlaneseq
    %v374 = vshrl.u32 %v373, 7
    %v375 = vsub.s32 1, %v374
    %v376 = vrot.slane %v367, %v375
    %v377 = vlaneseq
    %v378 = vshrl.u32 %v377, 7
    %v379 = vsub.s32 2, %v378
    %v380 = vrot.slane %v367, %v379
    %v381 = vlaneseq
    %v382 = vshrl.u32 %v381, 7
    %v383 = vsub.s32 3, %v382
    %v384 = vrot.slane %v367, %v383
    %v389 = vmul.f32 %v365, %v372
    %v390 = vmul.f32 %v364, %v376
    %v391 = vmul.f32 %v363, %v380
    %v392 = vmul.f32 %v362, %v384
    %v393 = vld [vmem:[#allocation5] sm:$0xff]
    %v394 = vpack.c.bf16 %v393, %v393
    %v395 = vpack.c.bf16 %v389, %v389
    %v396 = vpack.c.bf16 %v390, %v390
    %v397 = vpack.c.bf16 %v391, %v391
    %v398 = vpack.c.bf16 %v392, %v392
    %400 = vrot.lane.b32.xlu0 %v394, 124
    %v401 = vpop.permute.xlu0 %400
    %v403 = vsel %vm157, %v401, 0
    %v406 = vsel %vm161, %v395, 0
    %v409 = vsel %vm161, %v396, 0
    %v412 = vsel %vm161, %v397, 0
    %v415 = vsel %vm161, %v398, 0
    %417 = vmatprep.subr.bf16.mxu0 0
    %418 = vmatpush1.bf16.msra.mxu0 0
    %419 = vmatprep.subr.bf16.mxu0 0
    %420 = vmatpush1.bf16.msra.mxu0 0
    %421 = vmatprep.subr.bf16.mxu0 0
    %422 = vmatpush1.bf16.msra.mxu0 0
    %423 = vmatprep.subr.bf16.mxu0 0
    %424 = vmatpush1.bf16.msra.mxu0 0
    %425 = vmatprep.subr.bf16.mxu0 0
    %426 = vmatpush1.bf16.msra.mxu0 0
    %427 = vmatprep.subr.bf16.mxu0 0
    %428 = vmatpush1.bf16.msra.mxu0 0
    %429 = vmatprep.subr.bf16.mxu0 0
    %430 = vmatpush1.bf16.msra.mxu0 0
    %431 = vmatprep.subr.bf16.mxu0 %v409
    %432 = vmatpush1.bf16.msra.mxu0 %v406
    %433 = vmatprep.subr.bf16.mxu0 0
    %434 = vmatpush2.bf16.msra.mxu0 0
    %435 = vmatprep.subr.bf16.mxu0 0
    %436 = vmatpush2.bf16.msra.mxu0 0
    %437 = vmatprep.subr.bf16.mxu0 0
    %438 = vmatpush2.bf16.msra.mxu0 0
    %439 = vmatprep.subr.bf16.mxu0 0
    %440 = vmatpush2.bf16.msra.mxu0 0
    %441 = vmatprep.subr.bf16.mxu0 0
    %442 = vmatpush2.bf16.msra.mxu0 0
    %443 = vmatprep.subr.bf16.mxu0 0
    %444 = vmatpush2.bf16.msra.mxu0 0
    %445 = vmatprep.subr.bf16.mxu0 0
    %446 = vmatpush2.bf16.msra.mxu0 0
    %447 = vmatprep.subr.bf16.mxu0 0
    %448 = vmatpush2.bf16.msra.mxu0 0
    %449 = vmatprep.mubr.bf16.mxu0 0
    %450 = vmatmul.mubr.bf16.gmra.mxu0 %v403
    %v451 = vpop.f32.mrf.mxu0
    %v452 = vadd.f32 0.0, %v451
    %v453 = vpop.f32.mrf.mxu0
    %v454 = vadd.f32 0.0, %v453
    %v455 = vpop.f32.mrf.mxu0
    %v456 = vpop.f32.mrf.mxu0
    %457 = vdwg.mxu0
    %458 = vmatprep.subr.bf16.mxu0 0
    %459 = vmatpush1.bf16.msra.mxu0 0
    %460 = vmatprep.subr.bf16.mxu0 0
    %461 = vmatpush1.bf16.msra.mxu0 0
    %462 = vmatprep.subr.bf16.mxu0 0
    %463 = vmatpush1.bf16.msra.mxu0 0
    %464 = vmatprep.subr.bf16.mxu0 0
    %465 = vmatpush1.bf16.msra.mxu0 0
    %466 = vmatprep.subr.bf16.mxu0 0
    %467 = vmatpush1.bf16.msra.mxu0 0
    %468 = vmatprep.subr.bf16.mxu0 0
    %469 = vmatpush1.bf16.msra.mxu0 0
    %470 = vmatprep.subr.bf16.mxu0 0
    %471 = vmatpush1.bf16.msra.mxu0 0
    %472 = vmatprep.subr.bf16.mxu0 %v415
    %473 = vmatpush1.bf16.msra.mxu0 %v412
    %474 = vmatprep.subr.bf16.mxu0 0
    %475 = vmatpush2.bf16.msra.mxu0 0
    %476 = vmatprep.subr.bf16.mxu0 0
    %477 = vmatpush2.bf16.msra.mxu0 0
    %478 = vmatprep.subr.bf16.mxu0 0
    %479 = vmatpush2.bf16.msra.mxu0 0
    %480 = vmatprep.subr.bf16.mxu0 0
    %481 = vmatpush2.bf16.msra.mxu0 0
    %482 = vmatprep.subr.bf16.mxu0 0
    %483 = vmatpush2.bf16.msra.mxu0 0
    %484 = vmatprep.subr.bf16.mxu0 0
    %485 = vmatpush2.bf16.msra.mxu0 0
    %486 = vmatprep.subr.bf16.mxu0 0
    %487 = vmatpush2.bf16.msra.mxu0 0
    %488 = vmatprep.subr.bf16.mxu0 0
    %489 = vmatpush2.bf16.msra.mxu0 0
    %490 = vmatprep.mubr.bf16.mxu0 0
    %491 = vmatmul.mubr.bf16.gmra.mxu0 %v403
    %v492 = vpop.f32.mrf.mxu0
    %v493 = vadd.f32 0.0, %v492
    %v494 = vpop.f32.mrf.mxu0
    %v495 = vadd.f32 0.0, %v494
    %v496 = vpop.f32.mrf.mxu0
    %v497 = vpop.f32.mrf.mxu0
    %498 = vdwg.mxu0
    %v499 = vadd.f32 %v306, %v452
    %v500 = vadd.f32 %v308, %v454
    %v501 = vadd.f32 %v347, %v493
    %v502 = vadd.f32 %v349, %v495
    %503 = vrot.lane.b32.xlu0 %v48, 1
    %v504 = vpop.permute.xlu0 %503
    %505 = vrot.lane.b32.xlu0 %v56, 1
    %v506 = vpop.permute.xlu0 %505
    %507 = vrot.lane.b32.xlu0 %v55, 1
    %v508 = vpop.permute.xlu0 %507
    %509 = vrot.lane.b32.xlu0 %v57, 1
    %v510 = vpop.permute.xlu0 %509
    %vm511 = vcmp.lt.s32.totalorder %v71, 1
    %v512 = vsel %vm511, %v508, %v510
    %v513 = vsel %vm511, %v506, %v508
    %v514 = vsel %vm511, %v504, %v506
    %v515 = vsel %vm511, %v510, %v504
    %s516 = scalar_lea.vmem [#allocation5], 35
    %v517 = vld [vmem:[%s516] ss:$8 sm:$0xf]
    %v519 = vlaneseq
    %v520 = vshrl.u32 %v519, 7
    %v521 = vsub.s32 0, %v520
    %v522 = vrot.slane %v517, %v521
    %v523 = vlaneseq
    %v524 = vshrl.u32 %v523, 7
    %v525 = vsub.s32 1, %v524
    %v526 = vrot.slane %v517, %v525
    %v527 = vlaneseq
    %v528 = vshrl.u32 %v527, 7
    %v529 = vsub.s32 2, %v528
    %v530 = vrot.slane %v517, %v529
    %v531 = vlaneseq
    %v532 = vshrl.u32 %v531, 7
    %v533 = vsub.s32 3, %v532
    %v534 = vrot.slane %v517, %v533
    %v539 = vmul.f32 %v515, %v522
    %v540 = vmul.f32 %v514, %v526
    %v541 = vmul.f32 %v513, %v530
    %v542 = vmul.f32 %v512, %v534
    %v543 = vld [vmem:[#allocation5] sm:$0xff]
    %v544 = vpack.c.bf16 %v543, %v543
    %v545 = vpack.c.bf16 %v539, %v539
    %v546 = vpack.c.bf16 %v540, %v540
    %v547 = vpack.c.bf16 %v541, %v541
    %v548 = vpack.c.bf16 %v542, %v542
    %550 = vrot.lane.b32.xlu0 %v544, 122
    %v551 = vpop.permute.xlu0 %550
    %v553 = vsel %vm157, %v551, 0
    %v556 = vsel %vm161, %v545, 0
    %v559 = vsel %vm161, %v546, 0
    %v562 = vsel %vm161, %v547, 0
    %v565 = vsel %vm161, %v548, 0
    %567 = vmatprep.subr.bf16.mxu0 0
    %568 = vmatpush1.bf16.msra.mxu0 0
    %569 = vmatprep.subr.bf16.mxu0 0
    %570 = vmatpush1.bf16.msra.mxu0 0
    %571 = vmatprep.subr.bf16.mxu0 0
    %572 = vmatpush1.bf16.msra.mxu0 0
    %573 = vmatprep.subr.bf16.mxu0 0
    %574 = vmatpush1.bf16.msra.mxu0 0
    %575 = vmatprep.subr.bf16.mxu0 0
    %576 = vmatpush1.bf16.msra.mxu0 0
    %577 = vmatprep.subr.bf16.mxu0 0
    %578 = vmatpush1.bf16.msra.mxu0 0
    %579 = vmatprep.subr.bf16.mxu0 0
    %580 = vmatpush1.bf16.msra.mxu0 0
    %581 = vmatprep.subr.bf16.mxu0 %v559
    %582 = vmatpush1.bf16.msra.mxu0 %v556
    %583 = vmatprep.subr.bf16.mxu0 0
    %584 = vmatpush2.bf16.msra.mxu0 0
    %585 = vmatprep.subr.bf16.mxu0 0
    %586 = vmatpush2.bf16.msra.mxu0 0
    %587 = vmatprep.subr.bf16.mxu0 0
    %588 = vmatpush2.bf16.msra.mxu0 0
    %589 = vmatprep.subr.bf16.mxu0 0
    %590 = vmatpush2.bf16.msra.mxu0 0
    %591 = vmatprep.subr.bf16.mxu0 0
    %592 = vmatpush2.bf16.msra.mxu0 0
    %593 = vmatprep.subr.bf16.mxu0 0
    %594 = vmatpush2.bf16.msra.mxu0 0
    %595 = vmatprep.subr.bf16.mxu0 0
    %596 = vmatpush2.bf16.msra.mxu0 0
    %597 = vmatprep.subr.bf16.mxu0 0
    %598 = vmatpush2.bf16.msra.mxu0 0
    %599 = vmatprep.mubr.bf16.mxu0 0
    %600 = vmatmul.mubr.bf16.gmra.mxu0 %v553
    %v601 = vpop.f32.mrf.mxu0
    %v602 = vadd.f32 0.0, %v601
    %v603 = vpop.f32.mrf.mxu0
    %v604 = vadd.f32 0.0, %v603
    %v605 = vpop.f32.mrf.mxu0
    %v606 = vpop.f32.mrf.mxu0
    %607 = vdwg.mxu0
    %608 = vmatprep.subr.bf16.mxu0 0
    %609 = vmatpush1.bf16.msra.mxu0 0
    %610 = vmatprep.subr.bf16.mxu0 0
    %611 = vmatpush1.bf16.msra.mxu0 0
    %612 = vmatprep.subr.bf16.mxu0 0
    %613 = vmatpush1.bf16.msra.mxu0 0
    %614 = vmatprep.subr.bf16.mxu0 0
    %615 = vmatpush1.bf16.msra.mxu0 0
    %616 = vmatprep.subr.bf16.mxu0 0
    %617 = vmatpush1.bf16.msra.mxu0 0
    %618 = vmatprep.subr.bf16.mxu0 0
    %619 = vmatpush1.bf16.msra.mxu0 0
    %620 = vmatprep.subr.bf16.mxu0 0
    %621 = vmatpush1.bf16.msra.mxu0 0
    %622 = vmatprep.subr.bf16.mxu0 %v565
    %623 = vmatpush1.bf16.msra.mxu0 %v562
    %624 = vmatprep.subr.bf16.mxu0 0
    %625 = vmatpush2.bf16.msra.mxu0 0
    %626 = vmatprep.subr.bf16.mxu0 0
    %627 = vmatpush2.bf16.msra.mxu0 0
    %628 = vmatprep.subr.bf16.mxu0 0
    %629 = vmatpush2.bf16.msra.mxu0 0
    %630 = vmatprep.subr.bf16.mxu0 0
    %631 = vmatpush2.bf16.msra.mxu0 0
    %632 = vmatprep.subr.bf16.mxu0 0
    %633 = vmatpush2.bf16.msra.mxu0 0
    %634 = vmatprep.subr.bf16.mxu0 0
    %635 = vmatpush2.bf16.msra.mxu0 0
    %636 = vmatprep.subr.bf16.mxu0 0
    %637 = vmatpush2.bf16.msra.mxu0 0
    %638 = vmatprep.subr.bf16.mxu0 0
    %639 = vmatpush2.bf16.msra.mxu0 0
    %640 = vmatprep.mubr.bf16.mxu0 0
    %641 = vmatmul.mubr.bf16.gmra.mxu0 %v553
    %v642 = vpop.f32.mrf.mxu0
    %v643 = vadd.f32 0.0, %v642
    %v644 = vpop.f32.mrf.mxu0
    %v645 = vadd.f32 0.0, %v644
    %v646 = vpop.f32.mrf.mxu0
    %v647 = vpop.f32.mrf.mxu0
    %648 = vdwg.mxu0
    %v649 = vadd.f32 %v499, %v602
    %v650 = vadd.f32 %v500, %v604
    %v651 = vadd.f32 %v501, %v643
    %v652 = vadd.f32 %v502, %v645
    %v653 = vpack.c.bf16 %v48, %v48
    %v654 = vpack.c.bf16 %v56, %v56
    %v655 = vpack.c.bf16 %v55, %v55
    %v656 = vpack.c.bf16 %v57, %v57
    %657 = vrot.lane.b32.xlu0 %v544, 120
    %v658 = vpop.permute.xlu0 %657
    %v660 = vsel %vm157, %v658, 0
    %v663 = vsel %vm161, %v653, 0
    %v666 = vsel %vm161, %v654, 0
    %v669 = vsel %vm161, %v655, 0
    %v672 = vsel %vm161, %v656, 0
    %674 = vmatprep.subr.bf16.mxu0 0
    %675 = vmatpush1.bf16.msra.mxu0 0
    %676 = vmatprep.subr.bf16.mxu0 0
    %677 = vmatpush1.bf16.msra.mxu0 0
    %678 = vmatprep.subr.bf16.mxu0 0
    %679 = vmatpush1.bf16.msra.mxu0 0
    %680 = vmatprep.subr.bf16.mxu0 0
    %681 = vmatpush1.bf16.msra.mxu0 0
    %682 = vmatprep.subr.bf16.mxu0 0
    %683 = vmatpush1.bf16.msra.mxu0 0
    %684 = vmatprep.subr.bf16.mxu0 0
    %685 = vmatpush1.bf16.msra.mxu0 0
    %686 = vmatprep.subr.bf16.mxu0 0
    %687 = vmatpush1.bf16.msra.mxu0 0
    %688 = vmatprep.subr.bf16.mxu0 %v666
    %689 = vmatpush1.bf16.msra.mxu0 %v663
    %690 = vmatprep.subr.bf16.mxu0 0
    %691 = vmatpush2.bf16.msra.mxu0 0
    %692 = vmatprep.subr.bf16.mxu0 0
    %693 = vmatpush2.bf16.msra.mxu0 0
    %694 = vmatprep.subr.bf16.mxu0 0
    %695 = vmatpush2.bf16.msra.mxu0 0
    %696 = vmatprep.subr.bf16.mxu0 0
    %697 = vmatpush2.bf16.msra.mxu0 0
    %698 = vmatprep.subr.bf16.mxu0 0
    %699 = vmatpush2.bf16.msra.mxu0 0
    %700 = vmatprep.subr.bf16.mxu0 0
    %701 = vmatpush2.bf16.msra.mxu0 0
    %702 = vmatprep.subr.bf16.mxu0 0
    %703 = vmatpush2.bf16.msra.mxu0 0
    %704 = vmatprep.subr.bf16.mxu0 0
    %705 = vmatpush2.bf16.msra.mxu0 0
    %706 = vmatprep.mubr.bf16.mxu0 0
    %707 = vmatmul.mubr.bf16.gmra.mxu0 %v660
    %v708 = vpop.f32.mrf.mxu0
    %v709 = vadd.f32 0.0, %v708
    %v710 = vpop.f32.mrf.mxu0
    %v711 = vadd.f32 0.0, %v710
    %v712 = vpop.f32.mrf.mxu0
    %v713 = vpop.f32.mrf.mxu0
    %714 = vdwg.mxu0
    %715 = vmatprep.subr.bf16.mxu0 0
    %716 = vmatpush1.bf16.msra.mxu0 0
    %717 = vmatprep.subr.bf16.mxu0 0
    %718 = vmatpush1.bf16.msra.mxu0 0
    %719 = vmatprep.subr.bf16.mxu0 0
    %720 = vmatpush1.bf16.msra.mxu0 0
    %721 = vmatprep.subr.bf16.mxu0 0
    %722 = vmatpush1.bf16.msra.mxu0 0
    %723 = vmatprep.subr.bf16.mxu0 0
    %724 = vmatpush1.bf16.msra.mxu0 0
    %725 = vmatprep.subr.bf16.mxu0 0
    %726 = vmatpush1.bf16.msra.mxu0 0
    %727 = vmatprep.subr.bf16.mxu0 0
    %728 = vmatpush1.bf16.msra.mxu0 0
    %729 = vmatprep.subr.bf16.mxu0 %v672
    %730 = vmatpush1.bf16.msra.mxu0 %v669
    %731 = vmatprep.subr.bf16.mxu0 0
    %732 = vmatpush2.bf16.msra.mxu0 0
    %733 = vmatprep.subr.bf16.mxu0 0
    %734 = vmatpush2.bf16.msra.mxu0 0
    %735 = vmatprep.subr.bf16.mxu0 0
    %736 = vmatpush2.bf16.msra.mxu0 0
    %737 = vmatprep.subr.bf16.mxu0 0
    %738 = vmatpush2.bf16.msra.mxu0 0
    %739 = vmatprep.subr.bf16.mxu0 0
    %740 = vmatpush2.bf16.msra.mxu0 0
    %741 = vmatprep.subr.bf16.mxu0 0
    %742 = vmatpush2.bf16.msra.mxu0 0
    %743 = vmatprep.subr.bf16.mxu0 0
    %744 = vmatpush2.bf16.msra.mxu0 0
    %745 = vmatprep.subr.bf16.mxu0 0
    %746 = vmatpush2.bf16.msra.mxu0 0
    %747 = vmatprep.mubr.bf16.mxu0 0
    %748 = vmatmul.mubr.bf16.gmra.mxu0 %v660
    %v749 = vpop.f32.mrf.mxu0
    %v750 = vadd.f32 0.0, %v749
    %v751 = vpop.f32.mrf.mxu0
    %v752 = vadd.f32 0.0, %v751
    %v753 = vpop.f32.mrf.mxu0
    %v754 = vpop.f32.mrf.mxu0
    %755 = vdwg.mxu0
    %v756 = vadd.f32 %v649, %v709
    %v757 = vadd.f32 %v650, %v711
    %v758 = vadd.f32 %v651, %v750
    %v759 = vadd.f32 %v652, %v752
    %760 = vrot.lane.b32.xlu0 %v48, 127
    %v761 = vpop.permute.xlu0 %760
    %762 = vrot.lane.b32.xlu0 %v56, 127
    %v763 = vpop.permute.xlu0 %762
    %764 = vrot.lane.b32.xlu0 %v55, 127
    %v765 = vpop.permute.xlu0 %764
    %766 = vrot.lane.b32.xlu0 %v57, 127
    %v767 = vpop.permute.xlu0 %766
    %vm768 = vcmp.lt.s32.totalorder %v71, 127
    %v769 = vsel %vm768, %v765, %v767
    %v770 = vsel %vm768, %v763, %v765
    %v771 = vsel %vm768, %v761, %v763
    %v772 = vsel %vm768, %v767, %v761
    %s773 = scalar_lea.vmem [#allocation5], 37
    %v774 = vld [vmem:[%s773] ss:$8 sm:$0xf]
    %v776 = vlaneseq
    %v777 = vshrl.u32 %v776, 7
    %v778 = vsub.s32 0, %v777
    %v779 = vrot.slane %v774, %v778
    %v780 = vlaneseq
    %v781 = vshrl.u32 %v780, 7
    %v782 = vsub.s32 1, %v781
    %v783 = vrot.slane %v774, %v782
    %v784 = vlaneseq
    %v785 = vshrl.u32 %v784, 7
    %v786 = vsub.s32 2, %v785
    %v787 = vrot.slane %v774, %v786
    %v788 = vlaneseq
    %v789 = vshrl.u32 %v788, 7
    %v790 = vsub.s32 3, %v789
    %v791 = vrot.slane %v774, %v790
    %v796 = vmul.f32 %v771, %v779
    %v797 = vmul.f32 %v770, %v783
    %v798 = vmul.f32 %v769, %v787
    %v799 = vmul.f32 %v772, %v791
    %v800 = vld [vmem:[#allocation5] sm:$0xff]
    %v801 = vpack.c.bf16 %v800, %v800
    %v802 = vpack.c.bf16 %v796, %v796
    %v803 = vpack.c.bf16 %v797, %v797
    %v804 = vpack.c.bf16 %v798, %v798
    %v805 = vpack.c.bf16 %v799, %v799
    %807 = vrot.lane.b32.xlu0 %v801, 118
    %v808 = vpop.permute.xlu0 %807
    %v810 = vsel %vm157, %v808, 0
    %v813 = vsel %vm161, %v802, 0
    %v816 = vsel %vm161, %v803, 0
    %v819 = vsel %vm161, %v804, 0
    %v822 = vsel %vm161, %v805, 0
    %824 = vmatprep.subr.bf16.mxu0 0
    %825 = vmatpush1.bf16.msra.mxu0 0
    %826 = vmatprep.subr.bf16.mxu0 0
    %827 = vmatpush1.bf16.msra.mxu0 0
    %828 = vmatprep.subr.bf16.mxu0 0
    %829 = vmatpush1.bf16.msra.mxu0 0
    %830 = vmatprep.subr.bf16.mxu0 0
    %831 = vmatpush1.bf16.msra.mxu0 0
    %832 = vmatprep.subr.bf16.mxu0 0
    %833 = vmatpush1.bf16.msra.mxu0 0
    %834 = vmatprep.subr.bf16.mxu0 0
    %835 = vmatpush1.bf16.msra.mxu0 0
    %836 = vmatprep.subr.bf16.mxu0 0
    %837 = vmatpush1.bf16.msra.mxu0 0
    %838 = vmatprep.subr.bf16.mxu0 %v816
    %839 = vmatpush1.bf16.msra.mxu0 %v813
    %840 = vmatprep.subr.bf16.mxu0 0
    %841 = vmatpush2.bf16.msra.mxu0 0
    %842 = vmatprep.subr.bf16.mxu0 0
    %843 = vmatpush2.bf16.msra.mxu0 0
    %844 = vmatprep.subr.bf16.mxu0 0
    %845 = vmatpush2.bf16.msra.mxu0 0
    %846 = vmatprep.subr.bf16.mxu0 0
    %847 = vmatpush2.bf16.msra.mxu0 0
    %848 = vmatprep.subr.bf16.mxu0 0
    %849 = vmatpush2.bf16.msra.mxu0 0
    %850 = vmatprep.subr.bf16.mxu0 0
    %851 = vmatpush2.bf16.msra.mxu0 0
    %852 = vmatprep.subr.bf16.mxu0 0
    %853 = vmatpush2.bf16.msra.mxu0 0
    %854 = vmatprep.subr.bf16.mxu0 0
    %855 = vmatpush2.bf16.msra.mxu0 0
    %856 = vmatprep.mubr.bf16.mxu0 0
    %857 = vmatmul.mubr.bf16.gmra.mxu0 %v810
    %v858 = vpop.f32.mrf.mxu0
    %v859 = vadd.f32 0.0, %v858
    %v860 = vpop.f32.mrf.mxu0
    %v861 = vadd.f32 0.0, %v860
    %v862 = vpop.f32.mrf.mxu0
    %v863 = vpop.f32.mrf.mxu0
    %864 = vdwg.mxu0
    %865 = vmatprep.subr.bf16.mxu0 0
    %866 = vmatpush1.bf16.msra.mxu0 0
    %867 = vmatprep.subr.bf16.mxu0 0
    %868 = vmatpush1.bf16.msra.mxu0 0
    %869 = vmatprep.subr.bf16.mxu0 0
    %870 = vmatpush1.bf16.msra.mxu0 0
    %871 = vmatprep.subr.bf16.mxu0 0
    %872 = vmatpush1.bf16.msra.mxu0 0
    %873 = vmatprep.subr.bf16.mxu0 0
    %874 = vmatpush1.bf16.msra.mxu0 0
    %875 = vmatprep.subr.bf16.mxu0 0
    %876 = vmatpush1.bf16.msra.mxu0 0
    %877 = vmatprep.subr.bf16.mxu0 0
    %878 = vmatpush1.bf16.msra.mxu0 0
    %879 = vmatprep.subr.bf16.mxu0 %v822
    %880 = vmatpush1.bf16.msra.mxu0 %v819
    %881 = vmatprep.subr.bf16.mxu0 0
    %882 = vmatpush2.bf16.msra.mxu0 0
    %883 = vmatprep.subr.bf16.mxu0 0
    %884 = vmatpush2.bf16.msra.mxu0 0
    %885 = vmatprep.subr.bf16.mxu0 0
    %886 = vmatpush2.bf16.msra.mxu0 0
    %887 = vmatprep.subr.bf16.mxu0 0
    %888 = vmatpush2.bf16.msra.mxu0 0
    %889 = vmatprep.subr.bf16.mxu0 0
    %890 = vmatpush2.bf16.msra.mxu0 0
    %891 = vmatprep.subr.bf16.mxu0 0
    %892 = vmatpush2.bf16.msra.mxu0 0
    %893 = vmatprep.subr.bf16.mxu0 0
    %894 = vmatpush2.bf16.msra.mxu0 0
    %895 = vmatprep.subr.bf16.mxu0 0
    %896 = vmatpush2.bf16.msra.mxu0 0
    %897 = vmatprep.mubr.bf16.mxu0 0
    %898 = vmatmul.mubr.bf16.gmra.mxu0 %v810
    %v899 = vpop.f32.mrf.mxu0
    %v900 = vadd.f32 0.0, %v899
    %v901 = vpop.f32.mrf.mxu0
    %v902 = vadd.f32 0.0, %v901
    %v903 = vpop.f32.mrf.mxu0
    %v904 = vpop.f32.mrf.mxu0
    %905 = vdwg.mxu0
    %v906 = vadd.f32 %v756, %v859
    %v907 = vadd.f32 %v757, %v861
    %v908 = vadd.f32 %v758, %v900
    %v909 = vadd.f32 %v759, %v902
    %910 = vrot.lane.b32.xlu0 %v48, 113
    %v911 = vpop.permute.xlu0 %910
    %912 = vrot.lane.b32.xlu0 %v56, 113
    %v913 = vpop.permute.xlu0 %912
    %914 = vrot.lane.b32.xlu0 %v55, 113
    %v915 = vpop.permute.xlu0 %914
    %916 = vrot.lane.b32.xlu0 %v57, 113
    %v917 = vpop.permute.xlu0 %916
    %vm918 = vcmp.lt.s32.totalorder %v71, 113
    %v919 = vsel %vm918, %v915, %v917
    %v920 = vsel %vm918, %v913, %v915
    %v921 = vsel %vm918, %v911, %v913
    %v922 = vsel %vm918, %v917, %v911
    %s923 = scalar_lea.vmem [#allocation5], 38
    %v924 = vld [vmem:[%s923] ss:$8 sm:$0xf]
    %v926 = vlaneseq
    %v927 = vshrl.u32 %v926, 7
    %v928 = vsub.s32 0, %v927
    %v929 = vrot.slane %v924, %v928
    %v930 = vlaneseq
    %v931 = vshrl.u32 %v930, 7
    %v932 = vsub.s32 1, %v931
    %v933 = vrot.slane %v924, %v932
    %v934 = vlaneseq
    %v935 = vshrl.u32 %v934, 7
    %v936 = vsub.s32 2, %v935
    %v937 = vrot.slane %v924, %v936
    %v938 = vlaneseq
    %v939 = vshrl.u32 %v938, 7
    %v940 = vsub.s32 3, %v939
    %v941 = vrot.slane %v924, %v940
    %v946 = vmul.f32 %v921, %v929
    %v947 = vmul.f32 %v920, %v933
    %v948 = vmul.f32 %v919, %v937
    %v949 = vmul.f32 %v922, %v941
    %v950 = vld [vmem:[#allocation5] sm:$0xff]
    %v951 = vpack.c.bf16 %v950, %v950
    %v952 = vpack.c.bf16 %v946, %v946
    %v953 = vpack.c.bf16 %v947, %v947
    %v954 = vpack.c.bf16 %v948, %v948
    %v955 = vpack.c.bf16 %v949, %v949
    %957 = vrot.lane.b32.xlu0 %v951, 116
    %v958 = vpop.permute.xlu0 %957
    %v960 = vsel %vm157, %v958, 0
    %v963 = vsel %vm161, %v952, 0
    %v966 = vsel %vm161, %v953, 0
    %v969 = vsel %vm161, %v954, 0
    %v972 = vsel %vm161, %v955, 0
    %974 = vmatprep.subr.bf16.mxu0 0
    %975 = vmatpush1.bf16.msra.mxu0 0
    %976 = vmatprep.subr.bf16.mxu0 0
    %977 = vmatpush1.bf16.msra.mxu0 0
    %978 = vmatprep.subr.bf16.mxu0 0
    %979 = vmatpush1.bf16.msra.mxu0 0
    %980 = vmatprep.subr.bf16.mxu0 0
    %981 = vmatpush1.bf16.msra.mxu0 0
    %982 = vmatprep.subr.bf16.mxu0 0
    %983 = vmatpush1.bf16.msra.mxu0 0
    %984 = vmatprep.subr.bf16.mxu0 0
    %985 = vmatpush1.bf16.msra.mxu0 0
    %986 = vmatprep.subr.bf16.mxu0 0
    %987 = vmatpush1.bf16.msra.mxu0 0
    %988 = vmatprep.subr.bf16.mxu0 %v966
    %989 = vmatpush1.bf16.msra.mxu0 %v963
    %990 = vmatprep.subr.bf16.mxu0 0
    %991 = vmatpush2.bf16.msra.mxu0 0
    %992 = vmatprep.subr.bf16.mxu0 0
    %993 = vmatpush2.bf16.msra.mxu0 0
    %994 = vmatprep.subr.bf16.mxu0 0
    %995 = vmatpush2.bf16.msra.mxu0 0
    %996 = vmatprep.subr.bf16.mxu0 0
    %997 = vmatpush2.bf16.msra.mxu0 0
    %998 = vmatprep.subr.bf16.mxu0 0
    %999 = vmatpush2.bf16.msra.mxu0 0
    %1000 = vmatprep.subr.bf16.mxu0 0
    %1001 = vmatpush2.bf16.msra.mxu0 0
    %1002 = vmatprep.subr.bf16.mxu0 0
    %1003 = vmatpush2.bf16.msra.mxu0 0
    %1004 = vmatprep.subr.bf16.mxu0 0
    %1005 = vmatpush2.bf16.msra.mxu0 0
    %1006 = vmatprep.mubr.bf16.mxu0 0
    %1007 = vmatmul.mubr.bf16.gmra.mxu0 %v960
    %v1008 = vpop.f32.mrf.mxu0
    %v1009 = vadd.f32 0.0, %v1008
    %v1010 = vpop.f32.mrf.mxu0
    %v1011 = vadd.f32 0.0, %v1010
    %v1012 = vpop.f32.mrf.mxu0
    %v1013 = vpop.f32.mrf.mxu0
    %1014 = vdwg.mxu0
    %1015 = vmatprep.subr.bf16.mxu0 0
    %1016 = vmatpush1.bf16.msra.mxu0 0
    %1017 = vmatprep.subr.bf16.mxu0 0
    %1018 = vmatpush1.bf16.msra.mxu0 0
    %1019 = vmatprep.subr.bf16.mxu0 0
    %1020 = vmatpush1.bf16.msra.mxu0 0
    %1021 = vmatprep.subr.bf16.mxu0 0
    %1022 = vmatpush1.bf16.msra.mxu0 0
    %1023 = vmatprep.subr.bf16.mxu0 0
    %1024 = vmatpush1.bf16.msra.mxu0 0
    %1025 = vmatprep.subr.bf16.mxu0 0
    %1026 = vmatpush1.bf16.msra.mxu0 0
    %1027 = vmatprep.subr.bf16.mxu0 0
    %1028 = vmatpush1.bf16.msra.mxu0 0
    %1029 = vmatprep.subr.bf16.mxu0 %v972
    %1030 = vmatpush1.bf16.msra.mxu0 %v969
    %1031 = vmatprep.subr.bf16.mxu0 0
    %1032 = vmatpush2.bf16.msra.mxu0 0
    %1033 = vmatprep.subr.bf16.mxu0 0
    %1034 = vmatpush2.bf16.msra.mxu0 0
    %1035 = vmatprep.subr.bf16.mxu0 0
    %1036 = vmatpush2.bf16.msra.mxu0 0
    %1037 = vmatprep.subr.bf16.mxu0 0
    %1038 = vmatpush2.bf16.msra.mxu0 0
    %1039 = vmatprep.subr.bf16.mxu0 0
    %1040 = vmatpush2.bf16.msra.mxu0 0
    %1041 = vmatprep.subr.bf16.mxu0 0
    %1042 = vmatpush2.bf16.msra.mxu0 0
    %1043 = vmatprep.subr.bf16.mxu0 0
    %1044 = vmatpush2.bf16.msra.mxu0 0
    %1045 = vmatprep.subr.bf16.mxu0 0
    %1046 = vmatpush2.bf16.msra.mxu0 0
    %1047 = vmatprep.mubr.bf16.mxu0 0
    %1048 = vmatmul.mubr.bf16.gmra.mxu0 %v960
    %v1049 = vpop.f32.mrf.mxu0
    %v1050 = vadd.f32 0.0, %v1049
    %v1051 = vpop.f32.mrf.mxu0
    %v1052 = vadd.f32 0.0, %v1051
    %v1053 = vpop.f32.mrf.mxu0
    %v1054 = vpop.f32.mrf.mxu0
    %1055 = vdwg.mxu0
    %v1056 = vadd.f32 %v906, %v1009
    %v1057 = vadd.f32 %v907, %v1011
    %v1058 = vadd.f32 %v908, %v1050
    %v1059 = vadd.f32 %v909, %v1052
    %1060 = vrot.lane.b32.xlu0 %v48, 112
    %v1061 = vpop.permute.xlu0 %1060
    %1062 = vrot.lane.b32.xlu0 %v56, 112
    %v1063 = vpop.permute.xlu0 %1062
    %1064 = vrot.lane.b32.xlu0 %v55, 112
    %v1065 = vpop.permute.xlu0 %1064
    %1066 = vrot.lane.b32.xlu0 %v57, 112
    %v1067 = vpop.permute.xlu0 %1066
    %vm1068 = vcmp.lt.s32.totalorder %v71, 112
    %v1069 = vsel %vm1068, %v1065, %v1067
    %v1070 = vsel %vm1068, %v1063, %v1065
    %v1071 = vsel %vm1068, %v1061, %v1063
    %v1072 = vsel %vm1068, %v1067, %v1061
    %s1073 = scalar_lea.vmem [#allocation5], 39
    %v1074 = vld [vmem:[%s1073] ss:$8 sm:$0xf]
    %v1076 = vlaneseq
    %v1077 = vshrl.u32 %v1076, 7
    %v1078 = vsub.s32 0, %v1077
    %v1079 = vrot.slane %v1074, %v1078
    %v1080 = vlaneseq
    %v1081 = vshrl.u32 %v1080, 7
    %v1082 = vsub.s32 1, %v1081
    %v1083 = vrot.slane %v1074, %v1082
    %v1084 = vlaneseq
    %v1085 = vshrl.u32 %v1084, 7
    %v1086 = vsub.s32 2, %v1085
    %v1087 = vrot.slane %v1074, %v1086
    %v1088 = vlaneseq
    %v1089 = vshrl.u32 %v1088, 7
    %v1090 = vsub.s32 3, %v1089
    %v1091 = vrot.slane %v1074, %v1090
    %v1096 = vmul.f32 %v1071, %v1079
    %v1097 = vmul.f32 %v1070, %v1083
    %v1098 = vmul.f32 %v1069, %v1087
    %v1099 = vmul.f32 %v1072, %v1091
    %v1100 = vld [vmem:[#allocation5] sm:$0xff]
    %v1101 = vpack.c.bf16 %v1100, %v1100
    %v1102 = vpack.c.bf16 %v1096, %v1096
    %v1103 = vpack.c.bf16 %v1097, %v1097
    %v1104 = vpack.c.bf16 %v1098, %v1098
    %v1105 = vpack.c.bf16 %v1099, %v1099
    %1107 = vrot.lane.b32.xlu0 %v1101, 114
    %v1108 = vpop.permute.xlu0 %1107
    %v1110 = vsel %vm157, %v1108, 0
    %v1113 = vsel %vm161, %v1102, 0
    %v1116 = vsel %vm161, %v1103, 0
    %v1119 = vsel %vm161, %v1104, 0
    %v1122 = vsel %vm161, %v1105, 0
    %1124 = vmatprep.subr.bf16.mxu0 0
    %1125 = vmatpush1.bf16.msra.mxu0 0
    %1126 = vmatprep.subr.bf16.mxu0 0
    %1127 = vmatpush1.bf16.msra.mxu0 0
    %1128 = vmatprep.subr.bf16.mxu0 0
    %1129 = vmatpush1.bf16.msra.mxu0 0
    %1130 = vmatprep.subr.bf16.mxu0 0
    %1131 = vmatpush1.bf16.msra.mxu0 0
    %1132 = vmatprep.subr.bf16.mxu0 0
    %1133 = vmatpush1.bf16.msra.mxu0 0
    %1134 = vmatprep.subr.bf16.mxu0 0
    %1135 = vmatpush1.bf16.msra.mxu0 0
    %1136 = vmatprep.subr.bf16.mxu0 0
    %1137 = vmatpush1.bf16.msra.mxu0 0
    %1138 = vmatprep.subr.bf16.mxu0 %v1116
    %1139 = vmatpush1.bf16.msra.mxu0 %v1113
    %1140 = vmatprep.subr.bf16.mxu0 0
    %1141 = vmatpush2.bf16.msra.mxu0 0
    %1142 = vmatprep.subr.bf16.mxu0 0
    %1143 = vmatpush2.bf16.msra.mxu0 0
    %1144 = vmatprep.subr.bf16.mxu0 0
    %1145 = vmatpush2.bf16.msra.mxu0 0
    %1146 = vmatprep.subr.bf16.mxu0 0
    %1147 = vmatpush2.bf16.msra.mxu0 0
    %1148 = vmatprep.subr.bf16.mxu0 0
    %1149 = vmatpush2.bf16.msra.mxu0 0
    %1150 = vmatprep.subr.bf16.mxu0 0
    %1151 = vmatpush2.bf16.msra.mxu0 0
    %1152 = vmatprep.subr.bf16.mxu0 0
    %1153 = vmatpush2.bf16.msra.mxu0 0
    %1154 = vmatprep.subr.bf16.mxu0 0
    %1155 = vmatpush2.bf16.msra.mxu0 0
    %1156 = vmatprep.mubr.bf16.mxu0 0
    %1157 = vmatmul.mubr.bf16.gmra.mxu0 %v1110
    %v1158 = vpop.f32.mrf.mxu0
    %v1159 = vadd.f32 0.0, %v1158
    %v1160 = vpop.f32.mrf.mxu0
    %v1161 = vadd.f32 0.0, %v1160
    %v1162 = vpop.f32.mrf.mxu0
    %v1163 = vpop.f32.mrf.mxu0
    %1164 = vdwg.mxu0
    %1165 = vmatprep.subr.bf16.mxu0 0
    %1166 = vmatpush1.bf16.msra.mxu0 0
    %1167 = vmatprep.subr.bf16.mxu0 0
    %1168 = vmatpush1.bf16.msra.mxu0 0
    %1169 = vmatprep.subr.bf16.mxu0 0
    %1170 = vmatpush1.bf16.msra.mxu0 0
    %1171 = vmatprep.subr.bf16.mxu0 0
    %1172 = vmatpush1.bf16.msra.mxu0 0
    %1173 = vmatprep.subr.bf16.mxu0 0
    %1174 = vmatpush1.bf16.msra.mxu0 0
    %1175 = vmatprep.subr.bf16.mxu0 0
    %1176 = vmatpush1.bf16.msra.mxu0 0
    %1177 = vmatprep.subr.bf16.mxu0 0
    %1178 = vmatpush1.bf16.msra.mxu0 0
    %1179 = vmatprep.subr.bf16.mxu0 %v1122
    %1180 = vmatpush1.bf16.msra.mxu0 %v1119
    %1181 = vmatprep.subr.bf16.mxu0 0
    %1182 = vmatpush2.bf16.msra.mxu0 0
    %1183 = vmatprep.subr.bf16.mxu0 0
    %1184 = vmatpush2.bf16.msra.mxu0 0
    %1185 = vmatprep.subr.bf16.mxu0 0
    %1186 = vmatpush2.bf16.msra.mxu0 0
    %1187 = vmatprep.subr.bf16.mxu0 0
    %1188 = vmatpush2.bf16.msra.mxu0 0
    %1189 = vmatprep.subr.bf16.mxu0 0
    %1190 = vmatpush2.bf16.msra.mxu0 0
    %1191 = vmatprep.subr.bf16.mxu0 0
    %1192 = vmatpush2.bf16.msra.mxu0 0
    %1193 = vmatprep.subr.bf16.mxu0 0
    %1194 = vmatpush2.bf16.msra.mxu0 0
    %1195 = vmatprep.subr.bf16.mxu0 0
    %1196 = vmatpush2.bf16.msra.mxu0 0
    %1197 = vmatprep.mubr.bf16.mxu0 0
    %1198 = vmatmul.mubr.bf16.gmra.mxu0 %v1110
    %v1199 = vpop.f32.mrf.mxu0
    %v1200 = vadd.f32 0.0, %v1199
    %v1201 = vpop.f32.mrf.mxu0
    %v1202 = vadd.f32 0.0, %v1201
    %v1203 = vpop.f32.mrf.mxu0
    %v1204 = vpop.f32.mrf.mxu0
    %1205 = vdwg.mxu0
    %v1206 = vadd.f32 %v1056, %v1159
    %v1207 = vadd.f32 %v1057, %v1161
    %v1208 = vadd.f32 %v1058, %v1200
    %v1209 = vadd.f32 %v1059, %v1202
    %1210 = vrot.lane.b32.xlu0 %v48, 111
    %v1211 = vpop.permute.xlu0 %1210
    %1212 = vrot.lane.b32.xlu0 %v56, 111
    %v1213 = vpop.permute.xlu0 %1212
    %1214 = vrot.lane.b32.xlu0 %v55, 111
    %v1215 = vpop.permute.xlu0 %1214
    %1216 = vrot.lane.b32.xlu0 %v57, 111
    %v1217 = vpop.permute.xlu0 %1216
    %vm1218 = vcmp.lt.s32.totalorder %v71, 111
    %v1219 = vsel %vm1218, %v1215, %v1217
    %v1220 = vsel %vm1218, %v1213, %v1215
    %v1221 = vsel %vm1218, %v1211, %v1213
    %v1222 = vsel %vm1218, %v1217, %v1211
    %s1223 = scalar_lea.vmem [#allocation5], 64
    %v1224 = vld [vmem:[%s1223] ss:$8 sm:$0xf]
    %v1226 = vlaneseq
    %v1227 = vshrl.u32 %v1226, 7
    %v1228 = vsub.s32 0, %v1227
    %v1229 = vrot.slane %v1224, %v1228
    %v1230 = vlaneseq
    %v1231 = vshrl.u32 %v1230, 7
    %v1232 = vsub.s32 1, %v1231
    %v1233 = vrot.slane %v1224, %v1232
    %v1234 = vlaneseq
    %v1235 = vshrl.u32 %v1234, 7
    %v1236 = vsub.s32 2, %v1235
    %v1237 = vrot.slane %v1224, %v1236
    %v1238 = vlaneseq
    %v1239 = vshrl.u32 %v1238, 7
    %v1240 = vsub.s32 3, %v1239
    %v1241 = vrot.slane %v1224, %v1240
    %v1246 = vmul.f32 %v1221, %v1229
    %v1247 = vmul.f32 %v1220, %v1233
    %v1248 = vmul.f32 %v1219, %v1237
    %v1249 = vmul.f32 %v1222, %v1241
    %v1250 = vld [vmem:[#allocation5] sm:$0xff]
    %v1251 = vpack.c.bf16 %v1250, %v1250
    %v1252 = vpack.c.bf16 %v1246, %v1246
    %v1253 = vpack.c.bf16 %v1247, %v1247
    %v1254 = vpack.c.bf16 %v1248, %v1248
    %v1255 = vpack.c.bf16 %v1249, %v1249
    %1257 = vrot.lane.b32.xlu0 %v1251, 112
    %v1258 = vpop.permute.xlu0 %1257
    %v1260 = vsel %vm157, %v1258, 0
    %v1263 = vsel %vm161, %v1252, 0
    %v1266 = vsel %vm161, %v1253, 0
    %v1269 = vsel %vm161, %v1254, 0
    %v1272 = vsel %vm161, %v1255, 0
    %1274 = vmatprep.subr.bf16.mxu0 0
    %1275 = vmatpush1.bf16.msra.mxu0 0
    %1276 = vmatprep.subr.bf16.mxu0 0
    %1277 = vmatpush1.bf16.msra.mxu0 0
    %1278 = vmatprep.subr.bf16.mxu0 0
    %1279 = vmatpush1.bf16.msra.mxu0 0
    %1280 = vmatprep.subr.bf16.mxu0 0
    %1281 = vmatpush1.bf16.msra.mxu0 0
    %1282 = vmatprep.subr.bf16.mxu0 0
    %1283 = vmatpush1.bf16.msra.mxu0 0
    %1284 = vmatprep.subr.bf16.mxu0 0
    %1285 = vmatpush1.bf16.msra.mxu0 0
    %1286 = vmatprep.subr.bf16.mxu0 0
    %1287 = vmatpush1.bf16.msra.mxu0 0
    %1288 = vmatprep.subr.bf16.mxu0 %v1266
    %1289 = vmatpush1.bf16.msra.mxu0 %v1263
    %1290 = vmatprep.subr.bf16.mxu0 0
    %1291 = vmatpush2.bf16.msra.mxu0 0
    %1292 = vmatprep.subr.bf16.mxu0 0
    %1293 = vmatpush2.bf16.msra.mxu0 0
    %1294 = vmatprep.subr.bf16.mxu0 0
    %1295 = vmatpush2.bf16.msra.mxu0 0
    %1296 = vmatprep.subr.bf16.mxu0 0
    %1297 = vmatpush2.bf16.msra.mxu0 0
    %1298 = vmatprep.subr.bf16.mxu0 0
    %1299 = vmatpush2.bf16.msra.mxu0 0
    %1300 = vmatprep.subr.bf16.mxu0 0
    %1301 = vmatpush2.bf16.msra.mxu0 0
    %1302 = vmatprep.subr.bf16.mxu0 0
    %1303 = vmatpush2.bf16.msra.mxu0 0
    %1304 = vmatprep.subr.bf16.mxu0 0
    %1305 = vmatpush2.bf16.msra.mxu0 0
    %1306 = vmatprep.mubr.bf16.mxu0 0
    %1307 = vmatmul.mubr.bf16.gmra.mxu0 %v1260
    %v1308 = vpop.f32.mrf.mxu0
    %v1309 = vadd.f32 0.0, %v1308
    %v1310 = vpop.f32.mrf.mxu0
    %v1311 = vadd.f32 0.0, %v1310
    %v1312 = vpop.f32.mrf.mxu0
    %v1313 = vpop.f32.mrf.mxu0
    %1314 = vdwg.mxu0
    %1315 = vmatprep.subr.bf16.mxu0 0
    %1316 = vmatpush1.bf16.msra.mxu0 0
    %1317 = vmatprep.subr.bf16.mxu0 0
    %1318 = vmatpush1.bf16.msra.mxu0 0
    %1319 = vmatprep.subr.bf16.mxu0 0
    %1320 = vmatpush1.bf16.msra.mxu0 0
    %1321 = vmatprep.subr.bf16.mxu0 0
    %1322 = vmatpush1.bf16.msra.mxu0 0
    %1323 = vmatprep.subr.bf16.mxu0 0
    %1324 = vmatpush1.bf16.msra.mxu0 0
    %1325 = vmatprep.subr.bf16.mxu0 0
    %1326 = vmatpush1.bf16.msra.mxu0 0
    %1327 = vmatprep.subr.bf16.mxu0 0
    %1328 = vmatpush1.bf16.msra.mxu0 0
    %1329 = vmatprep.subr.bf16.mxu0 %v1272
    %1330 = vmatpush1.bf16.msra.mxu0 %v1269
    %1331 = vmatprep.subr.bf16.mxu0 0
    %1332 = vmatpush2.bf16.msra.mxu0 0
    %1333 = vmatprep.subr.bf16.mxu0 0
    %1334 = vmatpush2.bf16.msra.mxu0 0
    %1335 = vmatprep.subr.bf16.mxu0 0
    %1336 = vmatpush2.bf16.msra.mxu0 0
    %1337 = vmatprep.subr.bf16.mxu0 0
    %1338 = vmatpush2.bf16.msra.mxu0 0
    %1339 = vmatprep.subr.bf16.mxu0 0
    %1340 = vmatpush2.bf16.msra.mxu0 0
    %1341 = vmatprep.subr.bf16.mxu0 0
    %1342 = vmatpush2.bf16.msra.mxu0 0
    %1343 = vmatprep.subr.bf16.mxu0 0
    %1344 = vmatpush2.bf16.msra.mxu0 0
    %1345 = vmatprep.subr.bf16.mxu0 0
    %1346 = vmatpush2.bf16.msra.mxu0 0
    %1347 = vmatprep.mubr.bf16.mxu0 0
    %1348 = vmatmul.mubr.bf16.gmra.mxu0 %v1260
    %v1349 = vpop.f32.mrf.mxu0
    %v1350 = vadd.f32 0.0, %v1349
    %v1351 = vpop.f32.mrf.mxu0
    %v1352 = vadd.f32 0.0, %v1351
    %v1353 = vpop.f32.mrf.mxu0
    %v1354 = vpop.f32.mrf.mxu0
    %1355 = vdwg.mxu0
    %v1356 = vadd.f32 %v1206, %v1309
    %v1357 = vadd.f32 %v1207, %v1311
    %v1358 = vadd.f32 %v1208, %v1350
    %v1359 = vadd.f32 %v1209, %v1352
    %v1360 = vadd.f32 %v1356, %v1357
    %v1361 = vadd.f32 %v1360, %v1358
    %v1362 = vadd.f32 %v1361, %v1359
    %1363 = vadd.xlane.f32.xlu0 %v1362
    %v1364 = vpop.xlane.xlu0 %1363
    %v1365 = vrcp.pop 512.0
    %v1366 = vmul.f32 %v1364, %v1365
    %v1367 = vmul.f32 %v1356, %v1356
    %v1368 = vmul.f32 %v1357, %v1357
    %v1369 = vmul.f32 %v1358, %v1358
    %v1370 = vmul.f32 %v1359, %v1359
    %v1371 = vadd.f32 %v1367, %v1368
    %v1372 = vadd.f32 %v1371, %v1369
    %v1373 = vadd.f32 %v1372, %v1370
    %1374 = vadd.xlane.f32.xlu0 %v1373
    %v1375 = vpop.xlane.xlu0 %1374
    %v1376 = vmul.f32 %v1375, %v1365
    %v1377 = vmul.f32 %v1366, %v1366
    %v1378 = vsub.f32 %v1376, %v1377
    %v1379 = vsub.f32 %v1356, %v1366
    %v1380 = vsub.f32 %v1357, %v1366
    %v1381 = vsub.f32 %v1358, %v1366
    %v1382 = vsub.f32 %v1359, %v1366
    %v1383 = vadd.f32 %v1378, 1e-05
    %v1384 = vrsqrt.pop %v1383
    %v1385 = vmul.f32 %v1379, %v1384
    %v1386 = vmul.f32 %v1380, %v1384
    %v1387 = vmul.f32 %v1381, %v1384
    %v1388 = vmul.f32 %v1382, %v1384
    %1390 = vset.pattern.permute.xlu0 90
    %1391 = vperm.xlu0 %1390, %v1250
    %v1392 = vpop.permute.xlu0 %1391
    %v1394 = vmul.f32 %v1385, %v1392
    %v1395 = vmul.f32 %v1386, %v1392
    %v1396 = vmul.f32 %v1387, %v1392
    %v1397 = vmul.f32 %v1388, %v1392
    %1398 = vset.pattern.permute.xlu0 91
    %1399 = vperm.xlu0 %1398, %v1250
    %v1400 = vpop.permute.xlu0 %1399
    %v1402 = vadd.f32 %v1394, %v1400
    %v1403 = vadd.f32 %v1395, %v1400
    %v1404 = vadd.f32 %v1396, %v1400
    %v1405 = vadd.f32 %v1397, %v1400
    %v1406 = vtanh.pop %v1402
    %v1407 = vtanh.pop %v1403
    %v1408 = vtanh.pop %v1404
    %v1409 = vtanh.pop %v1405
    %1410 = vrot.lane.b32.xlu0 %v1406, 17
    %v1411 = vpop.permute.xlu0 %1410
    %1412 = vrot.lane.b32.xlu0 %v1407, 17
    %v1413 = vpop.permute.xlu0 %1412
    %1414 = vrot.lane.b32.xlu0 %v1408, 17
    %v1415 = vpop.permute.xlu0 %1414
    %1416 = vrot.lane.b32.xlu0 %v1409, 17
    %v1417 = vpop.permute.xlu0 %1416
    %v1418 = vsel %vm72, %v1415, %v1417
    %v1419 = vsel %vm72, %v1413, %v1415
    %v1420 = vsel %vm72, %v1411, %v1413
    %v1421 = vsel %vm72, %v1417, %v1411
    %v1422 = vmul.f32 %v1421, %v83
    %v1423 = vmul.f32 %v1420, %v87
    %v1424 = vmul.f32 %v1419, %v91
    %v1425 = vmul.f32 %v1418, %v95
    %v1426 = vld [vmem:[#allocation5] sm:$0x3]
    %v1427 = vpack.c.bf16 %v1426, %v1426
    %v1428 = vpack.c.bf16 %v1422, %v1422
    %v1429 = vpack.c.bf16 %v1423, %v1423
    %v1430 = vpack.c.bf16 %v1424, %v1424
    %v1431 = vpack.c.bf16 %v1425, %v1425
    %1432 = vrot.lane.b32.xlu0 %v1406, 16
    %v1433 = vpop.permute.xlu0 %1432
    %1434 = vrot.lane.b32.xlu0 %v1407, 16
    %v1435 = vpop.permute.xlu0 %1434
    %1436 = vrot.lane.b32.xlu0 %v1408, 16
    %v1437 = vpop.permute.xlu0 %1436
    %1438 = vrot.lane.b32.xlu0 %v1409, 16
    %v1439 = vpop.permute.xlu0 %1438
    %v1440 = vsel %vm118, %v1437, %v1439
    %v1441 = vsel %vm118, %v1435, %v1437
    %v1442 = vsel %vm118, %v1433, %v1435
    %v1443 = vsel %vm118, %v1439, %v1433
    %v1444 = vmul.f32 %v1443, %v129
    %v1445 = vmul.f32 %v1442, %v133
    %v1446 = vmul.f32 %v1441, %v137
    %v1447 = vmul.f32 %v1440, %v141
    %v1448 = vpack.c.bf16 %v1444, %v1444
    %v1449 = vpack.c.bf16 %v1445, %v1445
    %v1450 = vpack.c.bf16 %v1446, %v1446
    %v1451 = vpack.c.bf16 %v1447, %v1447
    %1453 = vrot.lane.b32.xlu0 %v1427, 102
    %v1454 = vpop.permute.xlu0 %1453
    %vm1455 = vcmask 64512
    %v1457 = vsel %vm1455, %v1454, 0
    %vm1459 = vcmask 1043456
    %v1461 = vsel %vm1459, %v1448, 0
    %v1464 = vsel %vm1459, %v1449, 0
    %v1467 = vsel %vm1459, %v1450, 0
    %v1470 = vsel %vm1459, %v1451, 0
    %1472 = vmatprep.subr.bf16.mxu0 0
    %1473 = vmatpush1.bf16.msra.mxu0 0
    %1474 = vmatprep.subr.bf16.mxu0 0
    %1475 = vmatpush1.bf16.msra.mxu0 0
    %1476 = vmatprep.subr.bf16.mxu0 0
    %1477 = vmatpush1.bf16.msra.mxu0 0
    %1478 = vmatprep.subr.bf16.mxu0 0
    %1479 = vmatpush1.bf16.msra.mxu0 0
    %1480 = vmatprep.subr.bf16.mxu0 0
    %1481 = vmatpush1.bf16.msra.mxu0 0
    %1482 = vmatprep.subr.bf16.mxu0 0
    %1483 = vmatpush1.bf16.msra.mxu0 0
    %1484 = vmatprep.subr.bf16.mxu0 0
    %1485 = vmatpush1.bf16.msra.mxu0 0
    %1486 = vmatprep.subr.bf16.mxu0 %v1464
    %1487 = vmatpush1.bf16.msra.mxu0 %v1461
    %1488 = vmatprep.subr.bf16.mxu0 0
    %1489 = vmatpush2.bf16.msra.mxu0 0
    %1490 = vmatprep.subr.bf16.mxu0 0
    %1491 = vmatpush2.bf16.msra.mxu0 0
    %1492 = vmatprep.subr.bf16.mxu0 0
    %1493 = vmatpush2.bf16.msra.mxu0 0
    %1494 = vmatprep.subr.bf16.mxu0 0
    %1495 = vmatpush2.bf16.msra.mxu0 0
    %1496 = vmatprep.subr.bf16.mxu0 0
    %1497 = vmatpush2.bf16.msra.mxu0 0
    %1498 = vmatprep.subr.bf16.mxu0 0
    %1499 = vmatpush2.bf16.msra.mxu0 0
    %1500 = vmatprep.subr.bf16.mxu0 0
    %1501 = vmatpush2.bf16.msra.mxu0 0
    %1502 = vmatprep.subr.bf16.mxu0 0
    %1503 = vmatpush2.bf16.msra.mxu0 0
    %1504 = vmatprep.mubr.bf16.mxu0 0
    %1505 = vmatmul.mubr.bf16.gmra.mxu0 %v1457
    %v1506 = vpop.f32.mrf.mxu0
    %v1507 = vadd.f32 0.0, %v1506
    %v1508 = vpop.f32.mrf.mxu0
    %v1509 = vadd.f32 0.0, %v1508
    %v1510 = vpop.f32.mrf.mxu0
    %v1511 = vpop.f32.mrf.mxu0
    %1512 = vdwg.mxu0
    %1513 = vmatprep.subr.bf16.mxu0 0
    %1514 = vmatpush1.bf16.msra.mxu0 0
    %1515 = vmatprep.subr.bf16.mxu0 0
    %1516 = vmatpush1.bf16.msra.mxu0 0
    %1517 = vmatprep.subr.bf16.mxu0 0
    %1518 = vmatpush1.bf16.msra.mxu0 0
    %1519 = vmatprep.subr.bf16.mxu0 0
    %1520 = vmatpush1.bf16.msra.mxu0 0
    %1521 = vmatprep.subr.bf16.mxu0 0
    %1522 = vmatpush1.bf16.msra.mxu0 0
    %1523 = vmatprep.subr.bf16.mxu0 0
    %1524 = vmatpush1.bf16.msra.mxu0 0
    %1525 = vmatprep.subr.bf16.mxu0 0
    %1526 = vmatpush1.bf16.msra.mxu0 0
    %1527 = vmatprep.subr.bf16.mxu0 %v1470
    %1528 = vmatpush1.bf16.msra.mxu0 %v1467
    %1529 = vmatprep.subr.bf16.mxu0 0
    %1530 = vmatpush2.bf16.msra.mxu0 0
    %1531 = vmatprep.subr.bf16.mxu0 0
    %1532 = vmatpush2.bf16.msra.mxu0 0
    %1533 = vmatprep.subr.bf16.mxu0 0
    %1534 = vmatpush2.bf16.msra.mxu0 0
    %1535 = vmatprep.subr.bf16.mxu0 0
    %1536 = vmatpush2.bf16.msra.mxu0 0
    %1537 = vmatprep.subr.bf16.mxu0 0
    %1538 = vmatpush2.bf16.msra.mxu0 0
    %1539 = vmatprep.subr.bf16.mxu0 0
    %1540 = vmatpush2.bf16.msra.mxu0 0
    %1541 = vmatprep.subr.bf16.mxu0 0
    %1542 = vmatpush2.bf16.msra.mxu0 0
    %1543 = vmatprep.subr.bf16.mxu0 0
    %1544 = vmatpush2.bf16.msra.mxu0 0
    %1545 = vmatprep.mubr.bf16.mxu0 0
    %1546 = vmatmul.mubr.bf16.gmra.mxu0 %v1457
    %v1547 = vpop.f32.mrf.mxu0
    %v1548 = vadd.f32 0.0, %v1547
    %v1549 = vpop.f32.mrf.mxu0
    %v1550 = vadd.f32 0.0, %v1549
    %v1551 = vpop.f32.mrf.mxu0
    %v1552 = vpop.f32.mrf.mxu0
    %1553 = vdwg.mxu0
    %1554 = vrot.lane.b32.xlu0 %v1427, 110
    %v1555 = vpop.permute.xlu0 %1554
    %v1557 = vsel %vm1455, %v1555, 0
    %v1560 = vsel %vm1459, %v1428, 0
    %v1563 = vsel %vm1459, %v1429, 0
    %v1566 = vsel %vm1459, %v1430, 0
    %v1569 = vsel %vm1459, %v1431, 0
    %1571 = vmatprep.subr.bf16.mxu0 0
    %1572 = vmatpush1.bf16.msra.mxu0 0
    %1573 = vmatprep.subr.bf16.mxu0 0
    %1574 = vmatpush1.bf16.msra.mxu0 0
    %1575 = vmatprep.subr.bf16.mxu0 0
    %1576 = vmatpush1.bf16.msra.mxu0 0
    %1577 = vmatprep.subr.bf16.mxu0 0
    %1578 = vmatpush1.bf16.msra.mxu0 0
    %1579 = vmatprep.subr.bf16.mxu0 0
    %1580 = vmatpush1.bf16.msra.mxu0 0
    %1581 = vmatprep.subr.bf16.mxu0 0
    %1582 = vmatpush1.bf16.msra.mxu0 0
    %1583 = vmatprep.subr.bf16.mxu0 0
    %1584 = vmatpush1.bf16.msra.mxu0 0
    %1585 = vmatprep.subr.bf16.mxu0 %v1563
    %1586 = vmatpush1.bf16.msra.mxu0 %v1560
    %1587 = vmatprep.subr.bf16.mxu0 0
    %1588 = vmatpush2.bf16.msra.mxu0 0
    %1589 = vmatprep.subr.bf16.mxu0 0
    %1590 = vmatpush2.bf16.msra.mxu0 0
    %1591 = vmatprep.subr.bf16.mxu0 0
    %1592 = vmatpush2.bf16.msra.mxu0 0
    %1593 = vmatprep.subr.bf16.mxu0 0
    %1594 = vmatpush2.bf16.msra.mxu0 0
    %1595 = vmatprep.subr.bf16.mxu0 0
    %1596 = vmatpush2.bf16.msra.mxu0 0
    %1597 = vmatprep.subr.bf16.mxu0 0
    %1598 = vmatpush2.bf16.msra.mxu0 0
    %1599 = vmatprep.subr.bf16.mxu0 0
    %1600 = vmatpush2.bf16.msra.mxu0 0
    %1601 = vmatprep.subr.bf16.mxu0 0
    %1602 = vmatpush2.bf16.msra.mxu0 0
    %1603 = vmatprep.mubr.bf16.mxu0 0
    %1604 = vmatmul.mubr.bf16.gmra.mxu0 %v1557
    %v1605 = vpop.f32.mrf.mxu0
    %v1606 = vadd.f32 %v1507, %v1605
    %v1607 = vpop.f32.mrf.mxu0
    %v1608 = vadd.f32 %v1509, %v1607
    %v1609 = vpop.f32.mrf.mxu0
    %v1610 = vpop.f32.mrf.mxu0
    %1611 = vdwg.mxu0
    %1612 = vmatprep.subr.bf16.mxu0 0
    %1613 = vmatpush1.bf16.msra.mxu0 0
    %1614 = vmatprep.subr.bf16.mxu0 0
    %1615 = vmatpush1.bf16.msra.mxu0 0
    %1616 = vmatprep.subr.bf16.mxu0 0
    %1617 = vmatpush1.bf16.msra.mxu0 0
    %1618 = vmatprep.subr.bf16.mxu0 0
    %1619 = vmatpush1.bf16.msra.mxu0 0
    %1620 = vmatprep.subr.bf16.mxu0 0
    %1621 = vmatpush1.bf16.msra.mxu0 0
    %1622 = vmatprep.subr.bf16.mxu0 0
    %1623 = vmatpush1.bf16.msra.mxu0 0
    %1624 = vmatprep.subr.bf16.mxu0 0
    %1625 = vmatpush1.bf16.msra.mxu0 0
    %1626 = vmatprep.subr.bf16.mxu0 %v1569
    %1627 = vmatpush1.bf16.msra.mxu0 %v1566
    %1628 = vmatprep.subr.bf16.mxu0 0
    %1629 = vmatpush2.bf16.msra.mxu0 0
    %1630 = vmatprep.subr.bf16.mxu0 0
    %1631 = vmatpush2.bf16.msra.mxu0 0
    %1632 = vmatprep.subr.bf16.mxu0 0
    %1633 = vmatpush2.bf16.msra.mxu0 0
    %1634 = vmatprep.subr.bf16.mxu0 0
    %1635 = vmatpush2.bf16.msra.mxu0 0
    %1636 = vmatprep.subr.bf16.mxu0 0
    %1637 = vmatpush2.bf16.msra.mxu0 0
    %1638 = vmatprep.subr.bf16.mxu0 0
    %1639 = vmatpush2.bf16.msra.mxu0 0
    %1640 = vmatprep.subr.bf16.mxu0 0
    %1641 = vmatpush2.bf16.msra.mxu0 0
    %1642 = vmatprep.subr.bf16.mxu0 0
    %1643 = vmatpush2.bf16.msra.mxu0 0
    %1644 = vmatprep.mubr.bf16.mxu0 0
    %1645 = vmatmul.mubr.bf16.gmra.mxu0 %v1557
    %v1646 = vpop.f32.mrf.mxu0
    %v1647 = vadd.f32 %v1548, %v1646
    %v1648 = vpop.f32.mrf.mxu0
    %v1649 = vadd.f32 %v1550, %v1648
    %v1650 = vpop.f32.mrf.mxu0
    %v1651 = vpop.f32.mrf.mxu0
    %1652 = vdwg.mxu0
    %1653 = vrot.lane.b32.xlu0 %v1406, 15
    %v1654 = vpop.permute.xlu0 %1653
    %1655 = vrot.lane.b32.xlu0 %v1407, 15
    %v1656 = vpop.permute.xlu0 %1655
    %1657 = vrot.lane.b32.xlu0 %v1408, 15
    %v1658 = vpop.permute.xlu0 %1657
    %1659 = vrot.lane.b32.xlu0 %v1409, 15
    %v1660 = vpop.permute.xlu0 %1659
    %v1661 = vsel %vm361, %v1658, %v1660
    %v1662 = vsel %vm361, %v1656, %v1658
    %v1663 = vsel %vm361, %v1654, %v1656
    %v1664 = vsel %vm361, %v1660, %v1654
    %v1665 = vmul.f32 %v1664, %v372
    %v1666 = vmul.f32 %v1663, %v376
    %v1667 = vmul.f32 %v1662, %v380
    %v1668 = vmul.f32 %v1661, %v384
    %v1669 = vpack.c.bf16 %v1665, %v1665
    %v1670 = vpack.c.bf16 %v1666, %v1666
    %v1671 = vpack.c.bf16 %v1667, %v1667
    %v1672 = vpack.c.bf16 %v1668, %v1668
    %1673 = vrot.lane.b32.xlu0 %v1427, 94
    %v1674 = vpop.permute.xlu0 %1673
    %v1676 = vsel %vm1455, %v1674, 0
    %v1679 = vsel %vm1459, %v1669, 0
    %v1682 = vsel %vm1459, %v1670, 0
    %v1685 = vsel %vm1459, %v1671, 0
    %v1688 = vsel %vm1459, %v1672, 0
    %1690 = vmatprep.subr.bf16.mxu0 0
    %1691 = vmatpush1.bf16.msra.mxu0 0
    %1692 = vmatprep.subr.bf16.mxu0 0
    %1693 = vmatpush1.bf16.msra.mxu0 0
    %1694 = vmatprep.subr.bf16.mxu0 0
    %1695 = vmatpush1.bf16.msra.mxu0 0
    %1696 = vmatprep.subr.bf16.mxu0 0
    %1697 = vmatpush1.bf16.msra.mxu0 0
    %1698 = vmatprep.subr.bf16.mxu0 0
    %1699 = vmatpush1.bf16.msra.mxu0 0
    %1700 = vmatprep.subr.bf16.mxu0 0
    %1701 = vmatpush1.bf16.msra.mxu0 0
    %1702 = vmatprep.subr.bf16.mxu0 0
    %1703 = vmatpush1.bf16.msra.mxu0 0
    %1704 = vmatprep.subr.bf16.mxu0 %v1682
    %1705 = vmatpush1.bf16.msra.mxu0 %v1679
    %1706 = vmatprep.subr.bf16.mxu0 0
    %1707 = vmatpush2.bf16.msra.mxu0 0
    %1708 = vmatprep.subr.bf16.mxu0 0
    %1709 = vmatpush2.bf16.msra.mxu0 0
    %1710 = vmatprep.subr.bf16.mxu0 0
    %1711 = vmatpush2.bf16.msra.mxu0 0
    %1712 = vmatprep.subr.bf16.mxu0 0
    %1713 = vmatpush2.bf16.msra.mxu0 0
    %1714 = vmatprep.subr.bf16.mxu0 0
    %1715 = vmatpush2.bf16.msra.mxu0 0
    %1716 = vmatprep.subr.bf16.mxu0 0
    %1717 = vmatpush2.bf16.msra.mxu0 0
    %1718 = vmatprep.subr.bf16.mxu0 0
    %1719 = vmatpush2.bf16.msra.mxu0 0
    %1720 = vmatprep.subr.bf16.mxu0 0
    %1721 = vmatpush2.bf16.msra.mxu0 0
    %1722 = vmatprep.mubr.bf16.mxu0 0
    %1723 = vmatmul.mubr.bf16.gmra.mxu0 %v1676
    %v1724 = vpop.f32.mrf.mxu0
    %v1725 = vadd.f32 0.0, %v1724
    %v1726 = vpop.f32.mrf.mxu0
    %v1727 = vadd.f32 0.0, %v1726
    %v1728 = vpop.f32.mrf.mxu0
    %v1729 = vpop.f32.mrf.mxu0
    %1730 = vdwg.mxu0
    %1731 = vmatprep.subr.bf16.mxu0 0
    %1732 = vmatpush1.bf16.msra.mxu0 0
    %1733 = vmatprep.subr.bf16.mxu0 0
    %1734 = vmatpush1.bf16.msra.mxu0 0
    %1735 = vmatprep.subr.bf16.mxu0 0
    %1736 = vmatpush1.bf16.msra.mxu0 0
    %1737 = vmatprep.subr.bf16.mxu0 0
    %1738 = vmatpush1.bf16.msra.mxu0 0
    %1739 = vmatprep.subr.bf16.mxu0 0
    %1740 = vmatpush1.bf16.msra.mxu0 0
    %1741 = vmatprep.subr.bf16.mxu0 0
    %1742 = vmatpush1.bf16.msra.mxu0 0
    %1743 = vmatprep.subr.bf16.mxu0 0
    %1744 = vmatpush1.bf16.msra.mxu0 0
    %1745 = vmatprep.subr.bf16.mxu0 %v1688
    %1746 = vmatpush1.bf16.msra.mxu0 %v1685
    %1747 = vmatprep.subr.bf16.mxu0 0
    %1748 = vmatpush2.bf16.msra.mxu0 0
    %1749 = vmatprep.subr.bf16.mxu0 0
    %1750 = vmatpush2.bf16.msra.mxu0 0
    %1751 = vmatprep.subr.bf16.mxu0 0
    %1752 = vmatpush2.bf16.msra.mxu0 0
    %1753 = vmatprep.subr.bf16.mxu0 0
    %1754 = vmatpush2.bf16.msra.mxu0 0
    %1755 = vmatprep.subr.bf16.mxu0 0
    %1756 = vmatpush2.bf16.msra.mxu0 0
    %1757 = vmatprep.subr.bf16.mxu0 0
    %1758 = vmatpush2.bf16.msra.mxu0 0
    %1759 = vmatprep.subr.bf16.mxu0 0
    %1760 = vmatpush2.bf16.msra.mxu0 0
    %1761 = vmatprep.subr.bf16.mxu0 0
    %1762 = vmatpush2.bf16.msra.mxu0 0
    %1763 = vmatprep.mubr.bf16.mxu0 0
    %1764 = vmatmul.mubr.bf16.gmra.mxu0 %v1676
    %v1765 = vpop.f32.mrf.mxu0
    %v1766 = vadd.f32 0.0, %v1765
    %v1767 = vpop.f32.mrf.mxu0
    %v1768 = vadd.f32 0.0, %v1767
    %v1769 = vpop.f32.mrf.mxu0
    %v1770 = vpop.f32.mrf.mxu0
    %1771 = vdwg.mxu0
    %v1772 = vadd.f32 %v1606, %v1725
    %v1773 = vadd.f32 %v1608, %v1727
    %v1774 = vadd.f32 %v1647, %v1766
    %v1775 = vadd.f32 %v1649, %v1768
    %1776 = vrot.lane.b32.xlu0 %v1406, 1
    %v1777 = vpop.permute.xlu0 %1776
    %1778 = vrot.lane.b32.xlu0 %v1407, 1
    %v1779 = vpop.permute.xlu0 %1778
    %1780 = vrot.lane.b32.xlu0 %v1408, 1
    %v1781 = vpop.permute.xlu0 %1780
    %1782 = vrot.lane.b32.xlu0 %v1409, 1
    %v1783 = vpop.permute.xlu0 %1782
    %v1784 = vsel %vm511, %v1781, %v1783
    %v1785 = vsel %vm511, %v1779, %v1781
    %v1786 = vsel %vm511, %v1777, %v1779
    %v1787 = vsel %vm511, %v1783, %v1777
    %v1788 = vmul.f32 %v1787, %v522
    %v1789 = vmul.f32 %v1786, %v526
    %v1790 = vmul.f32 %v1785, %v530
    %v1791 = vmul.f32 %v1784, %v534
    %v1792 = vpack.c.bf16 %v1788, %v1788
    %v1793 = vpack.c.bf16 %v1789, %v1789
    %v1794 = vpack.c.bf16 %v1790, %v1790
    %v1795 = vpack.c.bf16 %v1791, %v1791
    %1796 = vrot.lane.b32.xlu0 %v1427, 86
    %v1797 = vpop.permute.xlu0 %1796
    %v1799 = vsel %vm1455, %v1797, 0
    %v1802 = vsel %vm1459, %v1792, 0
    %v1805 = vsel %vm1459, %v1793, 0
    %v1808 = vsel %vm1459, %v1794, 0
    %v1811 = vsel %vm1459, %v1795, 0
    %1813 = vmatprep.subr.bf16.mxu0 0
    %1814 = vmatpush1.bf16.msra.mxu0 0
    %1815 = vmatprep.subr.bf16.mxu0 0
    %1816 = vmatpush1.bf16.msra.mxu0 0
    %1817 = vmatprep.subr.bf16.mxu0 0
    %1818 = vmatpush1.bf16.msra.mxu0 0
    %1819 = vmatprep.subr.bf16.mxu0 0
    %1820 = vmatpush1.bf16.msra.mxu0 0
    %1821 = vmatprep.subr.bf16.mxu0 0
    %1822 = vmatpush1.bf16.msra.mxu0 0
    %1823 = vmatprep.subr.bf16.mxu0 0
    %1824 = vmatpush1.bf16.msra.mxu0 0
    %1825 = vmatprep.subr.bf16.mxu0 0
    %1826 = vmatpush1.bf16.msra.mxu0 0
    %1827 = vmatprep.subr.bf16.mxu0 %v1805
    %1828 = vmatpush1.bf16.msra.mxu0 %v1802
    %1829 = vmatprep.subr.bf16.mxu0 0
    %1830 = vmatpush2.bf16.msra.mxu0 0
    %1831 = vmatprep.subr.bf16.mxu0 0
    %1832 = vmatpush2.bf16.msra.mxu0 0
    %1833 = vmatprep.subr.bf16.mxu0 0
    %1834 = vmatpush2.bf16.msra.mxu0 0
    %1835 = vmatprep.subr.bf16.mxu0 0
    %1836 = vmatpush2.bf16.msra.mxu0 0
    %1837 = vmatprep.subr.bf16.mxu0 0
    %1838 = vmatpush2.bf16.msra.mxu0 0
    %1839 = vmatprep.subr.bf16.mxu0 0
    %1840 = vmatpush2.bf16.msra.mxu0 0
    %1841 = vmatprep.subr.bf16.mxu0 0
    %1842 = vmatpush2.bf16.msra.mxu0 0
    %1843 = vmatprep.subr.bf16.mxu0 0
    %1844 = vmatpush2.bf16.msra.mxu0 0
    %1845 = vmatprep.mubr.bf16.mxu0 0
    %1846 = vmatmul.mubr.bf16.gmra.mxu0 %v1799
    %v1847 = vpop.f32.mrf.mxu0
    %v1848 = vadd.f32 0.0, %v1847
    %v1849 = vpop.f32.mrf.mxu0
    %v1850 = vadd.f32 0.0, %v1849
    %v1851 = vpop.f32.mrf.mxu0
    %v1852 = vpop.f32.mrf.mxu0
    %1853 = vdwg.mxu0
    %1854 = vmatprep.subr.bf16.mxu0 0
    %1855 = vmatpush1.bf16.msra.mxu0 0
    %1856 = vmatprep.subr.bf16.mxu0 0
    %1857 = vmatpush1.bf16.msra.mxu0 0
    %1858 = vmatprep.subr.bf16.mxu0 0
    %1859 = vmatpush1.bf16.msra.mxu0 0
    %1860 = vmatprep.subr.bf16.mxu0 0
    %1861 = vmatpush1.bf16.msra.mxu0 0
    %1862 = vmatprep.subr.bf16.mxu0 0
    %1863 = vmatpush1.bf16.msra.mxu0 0
    %1864 = vmatprep.subr.bf16.mxu0 0
    %1865 = vmatpush1.bf16.msra.mxu0 0
    %1866 = vmatprep.subr.bf16.mxu0 0
    %1867 = vmatpush1.bf16.msra.mxu0 0
    %1868 = vmatprep.subr.bf16.mxu0 %v1811
    %1869 = vmatpush1.bf16.msra.mxu0 %v1808
    %1870 = vmatprep.subr.bf16.mxu0 0
    %1871 = vmatpush2.bf16.msra.mxu0 0
    %1872 = vmatprep.subr.bf16.mxu0 0
    %1873 = vmatpush2.bf16.msra.mxu0 0
    %1874 = vmatprep.subr.bf16.mxu0 0
    %1875 = vmatpush2.bf16.msra.mxu0 0
    %1876 = vmatprep.subr.bf16.mxu0 0
    %1877 = vmatpush2.bf16.msra.mxu0 0
    %1878 = vmatprep.subr.bf16.mxu0 0
    %1879 = vmatpush2.bf16.msra.mxu0 0
    %1880 = vmatprep.subr.bf16.mxu0 0
    %1881 = vmatpush2.bf16.msra.mxu0 0
    %1882 = vmatprep.subr.bf16.mxu0 0
    %1883 = vmatpush2.bf16.msra.mxu0 0
    %1884 = vmatprep.subr.bf16.mxu0 0
    %1885 = vmatpush2.bf16.msra.mxu0 0
    %1886 = vmatprep.mubr.bf16.mxu0 0
    %1887 = vmatmul.mubr.bf16.gmra.mxu0 %v1799
    %v1888 = vpop.f32.mrf.mxu0
    %v1889 = vadd.f32 0.0, %v1888
    %v1890 = vpop.f32.mrf.mxu0
    %v1891 = vadd.f32 0.0, %v1890
    %v1892 = vpop.f32.mrf.mxu0
    %v1893 = vpop.f32.mrf.mxu0
    %1894 = vdwg.mxu0
    %v1895 = vadd.f32 %v1772, %v1848
    %v1896 = vadd.f32 %v1773, %v1850
    %v1897 = vadd.f32 %v1774, %v1889
    %v1898 = vadd.f32 %v1775, %v1891
    %v1899 = vpack.c.bf16 %v1406, %v1406
    %v1900 = vpack.c.bf16 %v1407, %v1407
    %v1901 = vpack.c.bf16 %v1408, %v1408
    %v1902 = vpack.c.bf16 %v1409, %v1409
    %1903 = vrot.lane.b32.xlu0 %v1427, 78
    %v1904 = vpop.permute.xlu0 %1903
    %v1906 = vsel %vm1455, %v1904, 0
    %v1909 = vsel %vm1459, %v1899, 0
    %v1912 = vsel %vm1459, %v1900, 0
    %v1915 = vsel %vm1459, %v1901, 0
    %v1918 = vsel %vm1459, %v1902, 0
    %1920 = vmatprep.subr.bf16.mxu0 0
    %1921 = vmatpush1.bf16.msra.mxu0 0
    %1922 = vmatprep.subr.bf16.mxu0 0
    %1923 = vmatpush1.bf16.msra.mxu0 0
    %1924 = vmatprep.subr.bf16.mxu0 0
    %1925 = vmatpush1.bf16.msra.mxu0 0
    %1926 = vmatprep.subr.bf16.mxu0 0
    %1927 = vmatpush1.bf16.msra.mxu0 0
    %1928 = vmatprep.subr.bf16.mxu0 0
    %1929 = vmatpush1.bf16.msra.mxu0 0
    %1930 = vmatprep.subr.bf16.mxu0 0
    %1931 = vmatpush1.bf16.msra.mxu0 0
    %1932 = vmatprep.subr.bf16.mxu0 0
    %1933 = vmatpush1.bf16.msra.mxu0 0
    %1934 = vmatprep.subr.bf16.mxu0 %v1912
    %1935 = vmatpush1.bf16.msra.mxu0 %v1909
    %1936 = vmatprep.subr.bf16.mxu0 0
    %1937 = vmatpush2.bf16.msra.mxu0 0
    %1938 = vmatprep.subr.bf16.mxu0 0
    %1939 = vmatpush2.bf16.msra.mxu0 0
    %1940 = vmatprep.subr.bf16.mxu0 0
    %1941 = vmatpush2.bf16.msra.mxu0 0
    %1942 = vmatprep.subr.bf16.mxu0 0
    %1943 = vmatpush2.bf16.msra.mxu0 0
    %1944 = vmatprep.subr.bf16.mxu0 0
    %1945 = vmatpush2.bf16.msra.mxu0 0
    %1946 = vmatprep.subr.bf16.mxu0 0
    %1947 = vmatpush2.bf16.msra.mxu0 0
    %1948 = vmatprep.subr.bf16.mxu0 0
    %1949 = vmatpush2.bf16.msra.mxu0 0
    %1950 = vmatprep.subr.bf16.mxu0 0
    %1951 = vmatpush2.bf16.msra.mxu0 0
    %1952 = vmatprep.mubr.bf16.mxu0 0
    %1953 = vmatmul.mubr.bf16.gmra.mxu0 %v1906
    %v1954 = vpop.f32.mrf.mxu0
    %v1955 = vadd.f32 0.0, %v1954
    %v1956 = vpop.f32.mrf.mxu0
    %v1957 = vadd.f32 0.0, %v1956
    %v1958 = vpop.f32.mrf.mxu0
    %v1959 = vpop.f32.mrf.mxu0
    %1960 = vdwg.mxu0
    %1961 = vmatprep.subr.bf16.mxu0 0
    %1962 = vmatpush1.bf16.msra.mxu0 0
    %1963 = vmatprep.subr.bf16.mxu0 0
    %1964 = vmatpush1.bf16.msra.mxu0 0
    %1965 = vmatprep.subr.bf16.mxu0 0
    %1966 = vmatpush1.bf16.msra.mxu0 0
    %1967 = vmatprep.subr.bf16.mxu0 0
    %1968 = vmatpush1.bf16.msra.mxu0 0
    %1969 = vmatprep.subr.bf16.mxu0 0
    %1970 = vmatpush1.bf16.msra.mxu0 0
    %1971 = vmatprep.subr.bf16.mxu0 0
    %1972 = vmatpush1.bf16.msra.mxu0 0
    %1973 = vmatprep.subr.bf16.mxu0 0
    %1974 = vmatpush1.bf16.msra.mxu0 0
    %1975 = vmatprep.subr.bf16.mxu0 %v1918
    %1976 = vmatpush1.bf16.msra.mxu0 %v1915
    %1977 = vmatprep.subr.bf16.mxu0 0
    %1978 = vmatpush2.bf16.msra.mxu0 0
    %1979 = vmatprep.subr.bf16.mxu0 0
    %1980 = vmatpush2.bf16.msra.mxu0 0
    %1981 = vmatprep.subr.bf16.mxu0 0
    %1982 = vmatpush2.bf16.msra.mxu0 0
    %1983 = vmatprep.subr.bf16.mxu0 0
    %1984 = vmatpush2.bf16.msra.mxu0 0
    %1985 = vmatprep.subr.bf16.mxu0 0
    %1986 = vmatpush2.bf16.msra.mxu0 0
    %1987 = vmatprep.subr.bf16.mxu0 0
    %1988 = vmatpush2.bf16.msra.mxu0 0
    %1989 = vmatprep.subr.bf16.mxu0 0
    %1990 = vmatpush2.bf16.msra.mxu0 0
    %1991 = vmatprep.subr.bf16.mxu0 0
    %1992 = vmatpush2.bf16.msra.mxu0 0
    %1993 = vmatprep.mubr.bf16.mxu0 0
    %1994 = vmatmul.mubr.bf16.gmra.mxu0 %v1906
    %v1995 = vpop.f32.mrf.mxu0
    %v1996 = vadd.f32 0.0, %v1995
    %v1997 = vpop.f32.mrf.mxu0
    %v1998 = vadd.f32 0.0, %v1997
    %v1999 = vpop.f32.mrf.mxu0
    %v2000 = vpop.f32.mrf.mxu0
    %2001 = vdwg.mxu0
    %v2002 = vadd.f32 %v1895, %v1955
    %v2003 = vadd.f32 %v1896, %v1957
    %v2004 = vadd.f32 %v1897, %v1996
    %v2005 = vadd.f32 %v1898, %v1998
    %2006 = vrot.lane.b32.xlu0 %v1406, 127
    %v2007 = vpop.permute.xlu0 %2006
    %2008 = vrot.lane.b32.xlu0 %v1407, 127
    %v2009 = vpop.permute.xlu0 %2008
    %2010 = vrot.lane.b32.xlu0 %v1408, 127
    %v2011 = vpop.permute.xlu0 %2010
    %2012 = vrot.lane.b32.xlu0 %v1409, 127
    %v2013 = vpop.permute.xlu0 %2012
    %v2014 = vsel %vm768, %v2011, %v2013
    %v2015 = vsel %vm768, %v2009, %v2011
    %v2016 = vsel %vm768, %v2007, %v2009
    %v2017 = vsel %vm768, %v2013, %v2007
    %v2018 = vmul.f32 %v2016, %v779
    %v2019 = vmul.f32 %v2015, %v783
    %v2020 = vmul.f32 %v2014, %v787
    %v2021 = vmul.f32 %v2017, %v791
    %v2022 = vpack.c.bf16 %v2018, %v2018
    %v2023 = vpack.c.bf16 %v2019, %v2019
    %v2024 = vpack.c.bf16 %v2020, %v2020
    %v2025 = vpack.c.bf16 %v2021, %v2021
    %2026 = vrot.lane.b32.xlu0 %v1427, 70
    %v2027 = vpop.permute.xlu0 %2026
    %v2029 = vsel %vm1455, %v2027, 0
    %v2032 = vsel %vm1459, %v2022, 0
    %v2035 = vsel %vm1459, %v2023, 0
    %v2038 = vsel %vm1459, %v2024, 0
    %v2041 = vsel %vm1459, %v2025, 0
    %2043 = vmatprep.subr.bf16.mxu0 0
    %2044 = vmatpush1.bf16.msra.mxu0 0
    %2045 = vmatprep.subr.bf16.mxu0 0
    %2046 = vmatpush1.bf16.msra.mxu0 0
    %2047 = vmatprep.subr.bf16.mxu0 0
    %2048 = vmatpush1.bf16.msra.mxu0 0
    %2049 = vmatprep.subr.bf16.mxu0 0
    %2050 = vmatpush1.bf16.msra.mxu0 0
    %2051 = vmatprep.subr.bf16.mxu0 0
    %2052 = vmatpush1.bf16.msra.mxu0 0
    %2053 = vmatprep.subr.bf16.mxu0 0
    %2054 = vmatpush1.bf16.msra.mxu0 0
    %2055 = vmatprep.subr.bf16.mxu0 0
    %2056 = vmatpush1.bf16.msra.mxu0 0
    %2057 = vmatprep.subr.bf16.mxu0 %v2035
    %2058 = vmatpush1.bf16.msra.mxu0 %v2032
    %2059 = vmatprep.subr.bf16.mxu0 0
    %2060 = vmatpush2.bf16.msra.mxu0 0
    %2061 = vmatprep.subr.bf16.mxu0 0
    %2062 = vmatpush2.bf16.msra.mxu0 0
    %2063 = vmatprep.subr.bf16.mxu0 0
    %2064 = vmatpush2.bf16.msra.mxu0 0
    %2065 = vmatprep.subr.bf16.mxu0 0
    %2066 = vmatpush2.bf16.msra.mxu0 0
    %2067 = vmatprep.subr.bf16.mxu0 0
    %2068 = vmatpush2.bf16.msra.mxu0 0
    %2069 = vmatprep.subr.bf16.mxu0 0
    %2070 = vmatpush2.bf16.msra.mxu0 0
    %2071 = vmatprep.subr.bf16.mxu0 0
    %2072 = vmatpush2.bf16.msra.mxu0 0
    %2073 = vmatprep.subr.bf16.mxu0 0
    %2074 = vmatpush2.bf16.msra.mxu0 0
    %2075 = vmatprep.mubr.bf16.mxu0 0
    %2076 = vmatmul.mubr.bf16.gmra.mxu0 %v2029
    %v2077 = vpop.f32.mrf.mxu0
    %v2078 = vadd.f32 0.0, %v2077
    %v2079 = vpop.f32.mrf.mxu0
    %v2080 = vadd.f32 0.0, %v2079
    %v2081 = vpop.f32.mrf.mxu0
    %v2082 = vpop.f32.mrf.mxu0
    %2083 = vdwg.mxu0
    %2084 = vmatprep.subr.bf16.mxu0 0
    %2085 = vmatpush1.bf16.msra.mxu0 0
    %2086 = vmatprep.subr.bf16.mxu0 0
    %2087 = vmatpush1.bf16.msra.mxu0 0
    %2088 = vmatprep.subr.bf16.mxu0 0
    %2089 = vmatpush1.bf16.msra.mxu0 0
    %2090 = vmatprep.subr.bf16.mxu0 0
    %2091 = vmatpush1.bf16.msra.mxu0 0
    %2092 = vmatprep.subr.bf16.mxu0 0
    %2093 = vmatpush1.bf16.msra.mxu0 0
    %2094 = vmatprep.subr.bf16.mxu0 0
    %2095 = vmatpush1.bf16.msra.mxu0 0
    %2096 = vmatprep.subr.bf16.mxu0 0
    %2097 = vmatpush1.bf16.msra.mxu0 0
    %2098 = vmatprep.subr.bf16.mxu0 %v2041
    %2099 = vmatpush1.bf16.msra.mxu0 %v2038
    %2100 = vmatprep.subr.bf16.mxu0 0
    %2101 = vmatpush2.bf16.msra.mxu0 0
    %2102 = vmatprep.subr.bf16.mxu0 0
    %2103 = vmatpush2.bf16.msra.mxu0 0
    %2104 = vmatprep.subr.bf16.mxu0 0
    %2105 = vmatpush2.bf16.msra.mxu0 0
    %2106 = vmatprep.subr.bf16.mxu0 0
    %2107 = vmatpush2.bf16.msra.mxu0 0
    %2108 = vmatprep.subr.bf16.mxu0 0
    %2109 = vmatpush2.bf16.msra.mxu0 0
    %2110 = vmatprep.subr.bf16.mxu0 0
    %2111 = vmatpush2.bf16.msra.mxu0 0
    %2112 = vmatprep.subr.bf16.mxu0 0
    %2113 = vmatpush2.bf16.msra.mxu0 0
    %2114 = vmatprep.subr.bf16.mxu0 0
    %2115 = vmatpush2.bf16.msra.mxu0 0
    %2116 = vmatprep.mubr.bf16.mxu0 0
    %2117 = vmatmul.mubr.bf16.gmra.mxu0 %v2029
    %v2118 = vpop.f32.mrf.mxu0
    %v2119 = vadd.f32 0.0, %v2118
    %v2120 = vpop.f32.mrf.mxu0
    %v2121 = vadd.f32 0.0, %v2120
    %v2122 = vpop.f32.mrf.mxu0
    %v2123 = vpop.f32.mrf.mxu0
    %2124 = vdwg.mxu0
    %v2125 = vadd.f32 %v2002, %v2078
    %v2126 = vadd.f32 %v2003, %v2080
    %v2127 = vadd.f32 %v2004, %v2119
    %v2128 = vadd.f32 %v2005, %v2121
    %2129 = vrot.lane.b32.xlu0 %v1406, 113
    %v2130 = vpop.permute.xlu0 %2129
    %2131 = vrot.lane.b32.xlu0 %v1407, 113
    %v2132 = vpop.permute.xlu0 %2131
    %2133 = vrot.lane.b32.xlu0 %v1408, 113
    %v2134 = vpop.permute.xlu0 %2133
    %2135 = vrot.lane.b32.xlu0 %v1409, 113
    %v2136 = vpop.permute.xlu0 %2135
    %v2137 = vsel %vm918, %v2134, %v2136
    %v2138 = vsel %vm918, %v2132, %v2134
    %v2139 = vsel %vm918, %v2130, %v2132
    %v2140 = vsel %vm918, %v2136, %v2130
    %v2141 = vmul.f32 %v2139, %v929
    %v2142 = vmul.f32 %v2138, %v933
    %v2143 = vmul.f32 %v2137, %v937
    %v2144 = vmul.f32 %v2140, %v941
    %v2145 = vpack.c.bf16 %v2141, %v2141
    %v2146 = vpack.c.bf16 %v2142, %v2142
    %v2147 = vpack.c.bf16 %v2143, %v2143
    %v2148 = vpack.c.bf16 %v2144, %v2144
    %2149 = vrot.lane.b32.xlu0 %v1427, 62
    %v2150 = vpop.permute.xlu0 %2149
    %v2152 = vsel %vm1455, %v2150, 0
    %v2155 = vsel %vm1459, %v2145, 0
    %v2158 = vsel %vm1459, %v2146, 0
    %v2161 = vsel %vm1459, %v2147, 0
    %v2164 = vsel %vm1459, %v2148, 0
    %2166 = vmatprep.subr.bf16.mxu0 0
    %2167 = vmatpush1.bf16.msra.mxu0 0
    %2168 = vmatprep.subr.bf16.mxu0 0
    %2169 = vmatpush1.bf16.msra.mxu0 0
    %2170 = vmatprep.subr.bf16.mxu0 0
    %2171 = vmatpush1.bf16.msra.mxu0 0
    %2172 = vmatprep.subr.bf16.mxu0 0
    %2173 = vmatpush1.bf16.msra.mxu0 0
    %2174 = vmatprep.subr.bf16.mxu0 0
    %2175 = vmatpush1.bf16.msra.mxu0 0
    %2176 = vmatprep.subr.bf16.mxu0 0
    %2177 = vmatpush1.bf16.msra.mxu0 0
    %2178 = vmatprep.subr.bf16.mxu0 0
    %2179 = vmatpush1.bf16.msra.mxu0 0
    %2180 = vmatprep.subr.bf16.mxu0 %v2158
    %2181 = vmatpush1.bf16.msra.mxu0 %v2155
    %2182 = vmatprep.subr.bf16.mxu0 0
    %2183 = vmatpush2.bf16.msra.mxu0 0
    %2184 = vmatprep.subr.bf16.mxu0 0
    %2185 = vmatpush2.bf16.msra.mxu0 0
    %2186 = vmatprep.subr.bf16.mxu0 0
    %2187 = vmatpush2.bf16.msra.mxu0 0
    %2188 = vmatprep.subr.bf16.mxu0 0
    %2189 = vmatpush2.bf16.msra.mxu0 0
    %2190 = vmatprep.subr.bf16.mxu0 0
    %2191 = vmatpush2.bf16.msra.mxu0 0
    %2192 = vmatprep.subr.bf16.mxu0 0
    %2193 = vmatpush2.bf16.msra.mxu0 0
    %2194 = vmatprep.subr.bf16.mxu0 0
    %2195 = vmatpush2.bf16.msra.mxu0 0
    %2196 = vmatprep.subr.bf16.mxu0 0
    %2197 = vmatpush2.bf16.msra.mxu0 0
    %2198 = vmatprep.mubr.bf16.mxu0 0
    %2199 = vmatmul.mubr.bf16.gmra.mxu0 %v2152
    %v2200 = vpop.f32.mrf.mxu0
    %v2201 = vadd.f32 0.0, %v2200
    %v2202 = vpop.f32.mrf.mxu0
    %v2203 = vadd.f32 0.0, %v2202
    %v2204 = vpop.f32.mrf.mxu0
    %v2205 = vpop.f32.mrf.mxu0
    %2206 = vdwg.mxu0
    %2207 = vmatprep.subr.bf16.mxu0 0
    %2208 = vmatpush1.bf16.msra.mxu0 0
    %2209 = vmatprep.subr.bf16.mxu0 0
    %2210 = vmatpush1.bf16.msra.mxu0 0
    %2211 = vmatprep.subr.bf16.mxu0 0
    %2212 = vmatpush1.bf16.msra.mxu0 0
    %2213 = vmatprep.subr.bf16.mxu0 0
    %2214 = vmatpush1.bf16.msra.mxu0 0
    %2215 = vmatprep.subr.bf16.mxu0 0
    %2216 = vmatpush1.bf16.msra.mxu0 0
    %2217 = vmatprep.subr.bf16.mxu0 0
    %2218 = vmatpush1.bf16.msra.mxu0 0
    %2219 = vmatprep.subr.bf16.mxu0 0
    %2220 = vmatpush1.bf16.msra.mxu0 0
    %2221 = vmatprep.subr.bf16.mxu0 %v2164
    %2222 = vmatpush1.bf16.msra.mxu0 %v2161
    %2223 = vmatprep.subr.bf16.mxu0 0
    %2224 = vmatpush2.bf16.msra.mxu0 0
    %2225 = vmatprep.subr.bf16.mxu0 0
    %2226 = vmatpush2.bf16.msra.mxu0 0
    %2227 = vmatprep.subr.bf16.mxu0 0
    %2228 = vmatpush2.bf16.msra.mxu0 0
    %2229 = vmatprep.subr.bf16.mxu0 0
    %2230 = vmatpush2.bf16.msra.mxu0 0
    %2231 = vmatprep.subr.bf16.mxu0 0
    %2232 = vmatpush2.bf16.msra.mxu0 0
    %2233 = vmatprep.subr.bf16.mxu0 0
    %2234 = vmatpush2.bf16.msra.mxu0 0
    %2235 = vmatprep.subr.bf16.mxu0 0
    %2236 = vmatpush2.bf16.msra.mxu0 0
    %2237 = vmatprep.subr.bf16.mxu0 0
    %2238 = vmatpush2.bf16.msra.mxu0 0
    %2239 = vmatprep.mubr.bf16.mxu0 0
    %2240 = vmatmul.mubr.bf16.gmra.mxu0 %v2152
    %v2241 = vpop.f32.mrf.mxu0
    %v2242 = vadd.f32 0.0, %v2241
    %v2243 = vpop.f32.mrf.mxu0
    %v2244 = vadd.f32 0.0, %v2243
    %v2245 = vpop.f32.mrf.mxu0
    %v2246 = vpop.f32.mrf.mxu0
    %2247 = vdwg.mxu0
    %v2248 = vadd.f32 %v2125, %v2201
    %v2249 = vadd.f32 %v2126, %v2203
    %v2250 = vadd.f32 %v2127, %v2242
    %v2251 = vadd.f32 %v2128, %v2244
    %2252 = vrot.lane.b32.xlu0 %v1406, 112
    %v2253 = vpop.permute.xlu0 %2252
    %2254 = vrot.lane.b32.xlu0 %v1407, 112
    %v2255 = vpop.permute.xlu0 %2254
    %2256 = vrot.lane.b32.xlu0 %v1408, 112
    %v2257 = vpop.permute.xlu0 %2256
    %2258 = vrot.lane.b32.xlu0 %v1409, 112
    %v2259 = vpop.permute.xlu0 %2258
    %v2260 = vsel %vm1068, %v2257, %v2259
    %v2261 = vsel %vm1068, %v2255, %v2257
    %v2262 = vsel %vm1068, %v2253, %v2255
    %v2263 = vsel %vm1068, %v2259, %v2253
    %v2264 = vmul.f32 %v2262, %v1079
    %v2265 = vmul.f32 %v2261, %v1083
    %v2266 = vmul.f32 %v2260, %v1087
    %v2267 = vmul.f32 %v2263, %v1091
    %v2268 = vpack.c.bf16 %v2264, %v2264
    %v2269 = vpack.c.bf16 %v2265, %v2265
    %v2270 = vpack.c.bf16 %v2266, %v2266
    %v2271 = vpack.c.bf16 %v2267, %v2267
    %2272 = vrot.lane.b32.xlu0 %v1427, 54
    %v2273 = vpop.permute.xlu0 %2272
    %v2275 = vsel %vm1455, %v2273, 0
    %v2278 = vsel %vm1459, %v2268, 0
    %v2281 = vsel %vm1459, %v2269, 0
    %v2284 = vsel %vm1459, %v2270, 0
    %v2287 = vsel %vm1459, %v2271, 0
    %2289 = vmatprep.subr.bf16.mxu0 0
    %2290 = vmatpush1.bf16.msra.mxu0 0
    %2291 = vmatprep.subr.bf16.mxu0 0
    %2292 = vmatpush1.bf16.msra.mxu0 0
    %2293 = vmatprep.subr.bf16.mxu0 0
    %2294 = vmatpush1.bf16.msra.mxu0 0
    %2295 = vmatprep.subr.bf16.mxu0 0
    %2296 = vmatpush1.bf16.msra.mxu0 0
    %2297 = vmatprep.subr.bf16.mxu0 0
    %2298 = vmatpush1.bf16.msra.mxu0 0
    %2299 = vmatprep.subr.bf16.mxu0 0
    %2300 = vmatpush1.bf16.msra.mxu0 0
    %2301 = vmatprep.subr.bf16.mxu0 0
    %2302 = vmatpush1.bf16.msra.mxu0 0
    %2303 = vmatprep.subr.bf16.mxu0 %v2281
    %2304 = vmatpush1.bf16.msra.mxu0 %v2278
    %2305 = vmatprep.subr.bf16.mxu0 0
    %2306 = vmatpush2.bf16.msra.mxu0 0
    %2307 = vmatprep.subr.bf16.mxu0 0
    %2308 = vmatpush2.bf16.msra.mxu0 0
    %2309 = vmatprep.subr.bf16.mxu0 0
    %2310 = vmatpush2.bf16.msra.mxu0 0
    %2311 = vmatprep.subr.bf16.mxu0 0
    %2312 = vmatpush2.bf16.msra.mxu0 0
    %2313 = vmatprep.subr.bf16.mxu0 0
    %2314 = vmatpush2.bf16.msra.mxu0 0
    %2315 = vmatprep.subr.bf16.mxu0 0
    %2316 = vmatpush2.bf16.msra.mxu0 0
    %2317 = vmatprep.subr.bf16.mxu0 0
    %2318 = vmatpush2.bf16.msra.mxu0 0
    %2319 = vmatprep.subr.bf16.mxu0 0
    %2320 = vmatpush2.bf16.msra.mxu0 0
    %2321 = vmatprep.mubr.bf16.mxu0 0
    %2322 = vmatmul.mubr.bf16.gmra.mxu0 %v2275
    %v2323 = vpop.f32.mrf.mxu0
    %v2324 = vadd.f32 0.0, %v2323
    %v2325 = vpop.f32.mrf.mxu0
    %v2326 = vadd.f32 0.0, %v2325
    %v2327 = vpop.f32.mrf.mxu0
    %v2328 = vpop.f32.mrf.mxu0
    %2329 = vdwg.mxu0
    %2330 = vmatprep.subr.bf16.mxu0 0
    %2331 = vmatpush1.bf16.msra.mxu0 0
    %2332 = vmatprep.subr.bf16.mxu0 0
    %2333 = vmatpush1.bf16.msra.mxu0 0
    %2334 = vmatprep.subr.bf16.mxu0 0
    %2335 = vmatpush1.bf16.msra.mxu0 0
    %2336 = vmatprep.subr.bf16.mxu0 0
    %2337 = vmatpush1.bf16.msra.mxu0 0
    %2338 = vmatprep.subr.bf16.mxu0 0
    %2339 = vmatpush1.bf16.msra.mxu0 0
    %2340 = vmatprep.subr.bf16.mxu0 0
    %2341 = vmatpush1.bf16.msra.mxu0 0
    %2342 = vmatprep.subr.bf16.mxu0 0
    %2343 = vmatpush1.bf16.msra.mxu0 0
    %2344 = vmatprep.subr.bf16.mxu0 %v2287
    %2345 = vmatpush1.bf16.msra.mxu0 %v2284
    %2346 = vmatprep.subr.bf16.mxu0 0
    %2347 = vmatpush2.bf16.msra.mxu0 0
    %2348 = vmatprep.subr.bf16.mxu0 0
    %2349 = vmatpush2.bf16.msra.mxu0 0
    %2350 = vmatprep.subr.bf16.mxu0 0
    %2351 = vmatpush2.bf16.msra.mxu0 0
    %2352 = vmatprep.subr.bf16.mxu0 0
    %2353 = vmatpush2.bf16.msra.mxu0 0
    %2354 = vmatprep.subr.bf16.mxu0 0
    %2355 = vmatpush2.bf16.msra.mxu0 0
    %2356 = vmatprep.subr.bf16.mxu0 0
    %2357 = vmatpush2.bf16.msra.mxu0 0
    %2358 = vmatprep.subr.bf16.mxu0 0
    %2359 = vmatpush2.bf16.msra.mxu0 0
    %2360 = vmatprep.subr.bf16.mxu0 0
    %2361 = vmatpush2.bf16.msra.mxu0 0
    %2362 = vmatprep.mubr.bf16.mxu0 0
    %2363 = vmatmul.mubr.bf16.gmra.mxu0 %v2275
    %v2364 = vpop.f32.mrf.mxu0
    %v2365 = vadd.f32 0.0, %v2364
    %v2366 = vpop.f32.mrf.mxu0
    %v2367 = vadd.f32 0.0, %v2366
    %v2368 = vpop.f32.mrf.mxu0
    %v2369 = vpop.f32.mrf.mxu0
    %2370 = vdwg.mxu0
    %v2371 = vadd.f32 %v2248, %v2324
    %v2372 = vadd.f32 %v2249, %v2326
    %v2373 = vadd.f32 %v2250, %v2365
    %v2374 = vadd.f32 %v2251, %v2367
    %2375 = vrot.lane.b32.xlu0 %v1406, 111
    %v2376 = vpop.permute.xlu0 %2375
    %2377 = vrot.lane.b32.xlu0 %v1407, 111
    %v2378 = vpop.permute.xlu0 %2377
    %2379 = vrot.lane.b32.xlu0 %v1408, 111
    %v2380 = vpop.permute.xlu0 %2379
    %2381 = vrot.lane.b32.xlu0 %v1409, 111
    %v2382 = vpop.permute.xlu0 %2381
    %v2383 = vsel %vm1218, %v2380, %v2382
    %v2384 = vsel %vm1218, %v2378, %v2380
    %v2385 = vsel %vm1218, %v2376, %v2378
    %v2386 = vsel %vm1218, %v2382, %v2376
    %v2387 = vmul.f32 %v2385, %v1229
    %v2388 = vmul.f32 %v2384, %v1233
    %v2389 = vmul.f32 %v2383, %v1237
    %v2390 = vmul.f32 %v2386, %v1241
    %v2391 = vpack.c.bf16 %v2387, %v2387
    %v2392 = vpack.c.bf16 %v2388, %v2388
    %v2393 = vpack.c.bf16 %v2389, %v2389
    %v2394 = vpack.c.bf16 %v2390, %v2390
    %2395 = vrot.lane.b32.xlu0 %v1427, 46
    %v2396 = vpop.permute.xlu0 %2395
    %v2398 = vsel %vm1455, %v2396, 0
    %v2401 = vsel %vm1459, %v2391, 0
    %v2404 = vsel %vm1459, %v2392, 0
    %v2407 = vsel %vm1459, %v2393, 0
    %v2410 = vsel %vm1459, %v2394, 0
    %2412 = vmatprep.subr.bf16.mxu0 0
    %2413 = vmatpush1.bf16.msra.mxu0 0
    %2414 = vmatprep.subr.bf16.mxu0 0
    %2415 = vmatpush1.bf16.msra.mxu0 0
    %2416 = vmatprep.subr.bf16.mxu0 0
    %2417 = vmatpush1.bf16.msra.mxu0 0
    %2418 = vmatprep.subr.bf16.mxu0 0
    %2419 = vmatpush1.bf16.msra.mxu0 0
    %2420 = vmatprep.subr.bf16.mxu0 0
    %2421 = vmatpush1.bf16.msra.mxu0 0
    %2422 = vmatprep.subr.bf16.mxu0 0
    %2423 = vmatpush1.bf16.msra.mxu0 0
    %2424 = vmatprep.subr.bf16.mxu0 0
    %2425 = vmatpush1.bf16.msra.mxu0 0
    %2426 = vmatprep.subr.bf16.mxu0 %v2404
    %2427 = vmatpush1.bf16.msra.mxu0 %v2401
    %2428 = vmatprep.subr.bf16.mxu0 0
    %2429 = vmatpush2.bf16.msra.mxu0 0
    %2430 = vmatprep.subr.bf16.mxu0 0
    %2431 = vmatpush2.bf16.msra.mxu0 0
    %2432 = vmatprep.subr.bf16.mxu0 0
    %2433 = vmatpush2.bf16.msra.mxu0 0
    %2434 = vmatprep.subr.bf16.mxu0 0
    %2435 = vmatpush2.bf16.msra.mxu0 0
    %2436 = vmatprep.subr.bf16.mxu0 0
    %2437 = vmatpush2.bf16.msra.mxu0 0
    %2438 = vmatprep.subr.bf16.mxu0 0
    %2439 = vmatpush2.bf16.msra.mxu0 0
    %2440 = vmatprep.subr.bf16.mxu0 0
    %2441 = vmatpush2.bf16.msra.mxu0 0
    %2442 = vmatprep.subr.bf16.mxu0 0
    %2443 = vmatpush2.bf16.msra.mxu0 0
    %2444 = vmatprep.mubr.bf16.mxu0 0
    %2445 = vmatmul.mubr.bf16.gmra.mxu0 %v2398
    %v2446 = vpop.f32.mrf.mxu0
    %v2447 = vadd.f32 0.0, %v2446
    %v2448 = vpop.f32.mrf.mxu0
    %v2449 = vadd.f32 0.0, %v2448
    %v2450 = vpop.f32.mrf.mxu0
    %v2451 = vpop.f32.mrf.mxu0
    %2452 = vdwg.mxu0
    %2453 = vmatprep.subr.bf16.mxu0 0
    %2454 = vmatpush1.bf16.msra.mxu0 0
    %2455 = vmatprep.subr.bf16.mxu0 0
    %2456 = vmatpush1.bf16.msra.mxu0 0
    %2457 = vmatprep.subr.bf16.mxu0 0
    %2458 = vmatpush1.bf16.msra.mxu0 0
    %2459 = vmatprep.subr.bf16.mxu0 0
    %2460 = vmatpush1.bf16.msra.mxu0 0
    %2461 = vmatprep.subr.bf16.mxu0 0
    %2462 = vmatpush1.bf16.msra.mxu0 0
    %2463 = vmatprep.subr.bf16.mxu0 0
    %2464 = vmatpush1.bf16.msra.mxu0 0
    %2465 = vmatprep.subr.bf16.mxu0 0
    %2466 = vmatpush1.bf16.msra.mxu0 0
    %2467 = vmatprep.subr.bf16.mxu0 %v2410
    %2468 = vmatpush1.bf16.msra.mxu0 %v2407
    %2469 = vmatprep.subr.bf16.mxu0 0
    %2470 = vmatpush2.bf16.msra.mxu0 0
    %2471 = vmatprep.subr.bf16.mxu0 0
    %2472 = vmatpush2.bf16.msra.mxu0 0
    %2473 = vmatprep.subr.bf16.mxu0 0
    %2474 = vmatpush2.bf16.msra.mxu0 0
    %2475 = vmatprep.subr.bf16.mxu0 0
    %2476 = vmatpush2.bf16.msra.mxu0 0
    %2477 = vmatprep.subr.bf16.mxu0 0
    %2478 = vmatpush2.bf16.msra.mxu0 0
    %2479 = vmatprep.subr.bf16.mxu0 0
    %2480 = vmatpush2.bf16.msra.mxu0 0
    %2481 = vmatprep.subr.bf16.mxu0 0
    %2482 = vmatpush2.bf16.msra.mxu0 0
    %2483 = vmatprep.subr.bf16.mxu0 0
    %2484 = vmatpush2.bf16.msra.mxu0 0
    %2485 = vmatprep.mubr.bf16.mxu0 0
    %2486 = vmatmul.mubr.bf16.gmra.mxu0 %v2398
    %v2487 = vpop.f32.mrf.mxu0
    %v2488 = vadd.f32 0.0, %v2487
    %v2489 = vpop.f32.mrf.mxu0
    %v2490 = vadd.f32 0.0, %v2489
    %v2491 = vpop.f32.mrf.mxu0
    %v2492 = vpop.f32.mrf.mxu0
    %2493 = vdwg.mxu0
    %v2494 = vadd.f32 %v2371, %v2447
    %v2495 = vadd.f32 %v2372, %v2449
    %v2496 = vadd.f32 %v2373, %v2488
    %v2497 = vadd.f32 %v2374, %v2490
    %vm2498 = vcmask 1041408
    %v2499 = vsel %vm2498, %v2494, 0.0
    %v2500 = vsel %vm2498, %v2495, 0.0
    %v2501 = vadd.f32 %v2499, %v2500
    %v2502 = vsel %vm2498, %v2496, 0.0
    %v2503 = vadd.f32 %v2501, %v2502
    %v2504 = vsel %vm2498, %v2497, 0.0
    %v2505 = vadd.f32 %v2503, %v2504
    %2506 = vadd.xlane.f32.xlu0 %v2505
    %v2507 = vpop.xlane.xlu0 %2506
    %v2508 = vmul.f32 %v2507, %v1365
    %v2509 = vmul.f32 %v2494, %v2494
    %v2510 = vmul.f32 %v2495, %v2495
    %v2511 = vmul.f32 %v2496, %v2496
    %v2512 = vmul.f32 %v2497, %v2497
    %v2513 = vsel %vm2498, %v2509, 0.0
    %v2514 = vsel %vm2498, %v2510, 0.0
    %v2515 = vadd.f32 %v2513, %v2514
    %v2516 = vsel %vm2498, %v2511, 0.0
    %v2517 = vadd.f32 %v2515, %v2516
    %v2518 = vsel %vm2498, %v2512, 0.0
    %v2519 = vadd.f32 %v2517, %v2518
    %2520 = vadd.xlane.f32.xlu0 %v2519
    %v2521 = vpop.xlane.xlu0 %2520
    %v2522 = vmul.f32 %v2521, %v1365
    %v2523 = vmul.f32 %v2508, %v2508
    %v2524 = vsub.f32 %v2522, %v2523
    %v2525 = vsub.f32 %v2494, %v2508
    %v2526 = vsub.f32 %v2495, %v2508
    %v2527 = vsub.f32 %v2496, %v2508
    %v2528 = vsub.f32 %v2497, %v2508
    %v2529 = vadd.f32 %v2524, 1e-05
    %v2530 = vrsqrt.pop %v2529
    %v2531 = vmul.f32 %v2525, %v2530
    %v2532 = vmul.f32 %v2526, %v2530
    %v2533 = vmul.f32 %v2527, %v2530
    %v2534 = vmul.f32 %v2528, %v2530
    %2536 = vset.pattern.permute.xlu0 92
    %2537 = vperm.xlu0 %2536, %v1426
    %v2538 = vpop.permute.xlu0 %2537
    %v2540 = vmul.f32 %v2531, %v2538
    %v2541 = vmul.f32 %v2532, %v2538
    %v2542 = vmul.f32 %v2533, %v2538
    %v2543 = vmul.f32 %v2534, %v2538
    %2544 = vset.pattern.permute.xlu0 93
    %2545 = vperm.xlu0 %2544, %v1426
    %v2546 = vpop.permute.xlu0 %2545
    %v2548 = vadd.f32 %v2540, %v2546
    %v2549 = vadd.f32 %v2541, %v2546
    %v2550 = vadd.f32 %v2542, %v2546
    %v2551 = vadd.f32 %v2543, %v2546
    %v2552 = vtanh.pop %v2548
    %v2553 = vtanh.pop %v2549
    %v2554 = vtanh.pop %v2550
    %v2555 = vtanh.pop %v2551
    %v2560 = vcombine.low %v2552, %v2553
    %v2561 = vcombine.low %v2554, %v2555
    %v2563 = vunpack.c.l.s4 1983009808
    %v2564 = vunpack.c.0.s8 %v2563
    %v2565 = vlaneseq
    %v2566 = vshrl.u32 %v2565, 7
    %v2567 = vsub.s32 %v2564, %v2566
    %v2568 = vrot.slane %v2560, %v2567
    %v2570 = vunpack.c.l.s4 1983009808
    %v2571 = vunpack.c.0.s8 %v2570
    %v2572 = vlaneseq
    %v2573 = vshrl.u32 %v2572, 7
    %v2574 = vsub.s32 %v2571, %v2573
    %v2575 = vrot.slane %v2561, %v2574
    %v2576 = vcombine.low %v2568, %v2575
    %2578 = vst [vmem:[#allocation7] sm:$0xff] %v2576
    // Predicated region
    $region18: #{tpu_custom_call.1} parent=1 // pred_check
      _
    $region19: #{tpu_custom_call.1} parent=1 // pred_check_branch
      %2580 = sbr.rel (0) target = $region21
    $region20: #{tpu_custom_call.1} parent=1 // pred_region
      %s2582 = ssub.s32 128, 128
      %2583 = vsyncadd [#allocation4], %s2582
      %s2585 = sshll.u32 [#allocation7], 4
      %s2586 = int_to_ptr.vmem [resolvable:$true] %s2585
      %2588 = dma.vmem_to_hbm [thread:$0]  %s2586, 128, %s2, [#allocation4]
    $region21: #{tpu_custom_call.1} parent=1 // pred_fallthru
      _
    // Predicated region
    $region22: #{tpu_custom_call.1} parent=1 // pred_check
      _
    $region23: #{tpu_custom_call.1} parent=1 // pred_check_branch
      %2590 = sbr.rel (0) target = $region25
    $region24: #{tpu_custom_call.1} parent=1 // pred_region
      %2591 = dma.done [#allocation4], 128
    $region25: #{tpu_custom_call.1} parent=1 // pred_fallthru
      _
    %2592 = vsyncpa [#allocation3], 1
    %2593 = vsyncpa [#allocation6], 1
    %2594 = vsyncpa [#allocation4], 1

</llo_original>
